<compile_context>
chip_gen: v7x
topology: tpu7x:2x2x1
jax: 0.10.0
libtpu: 0.0.40
codegen_flags: <defaults>
</compile_context>

<pallas_src>
import functools

import jax
import jax.numpy as jnp
from jax.experimental import pallas as pl
from jax.experimental.pallas import tpu as pltpu


# ----------------------------------------------------------------------------
# align_corners=True bilinear interpolation matrix  (out_size, in_size)
# ----------------------------------------------------------------------------
def _interp_matrix(out_size, in_size):
    if out_size == 1:
        src = jnp.zeros((1,), jnp.float32)
    else:
        src = jnp.arange(out_size, dtype=jnp.float32) * ((in_size - 1) / (out_size - 1))
    i0 = jnp.clip(jnp.floor(src).astype(jnp.int32), 0, in_size - 1)
    i1 = jnp.clip(i0 + 1, 0, in_size - 1)
    w1 = src - i0.astype(jnp.float32)
    w0 = 1.0 - w1
    m = (w0[:, None] * jax.nn.one_hot(i0, in_size, dtype=jnp.float32)
         + w1[:, None] * jax.nn.one_hot(i1, in_size, dtype=jnp.float32))
    return m  # (out_size, in_size)


# ----------------------------------------------------------------------------
# fused kernel: W-resize matmul -> conv matmul (H-resize folded in) -> BatchNorm
# ----------------------------------------------------------------------------
def _fused_kernel(x_ref, bt_ref, g_ref, gam_ref, bet_ref, avg_ref, o_ref,
                  *, K, eps):
    # x_ref   : (N*Wi, Cin*Hi)        bf16  rows (n,wi), lanes (c,hi)
    # bt_ref  : (K, N*Wo, N*Wi)       bf16  per-kw W-resize (halo + kw shift folded)
    # g_ref   : (K, Cin*Hi, Cblk*Ho)  bf16  conv weights with H-resize folded in
    # gam/bet : (1, Cblk*Ho)          f32   gamma/beta expanded along (co,u) lanes
    # avg_ref : (Cblk*Ho, Cblk*Ho)    f32   per-channel averaging / broadcast matrix
    # o_ref   : (N*Wo, Cblk*Ho)       f32   rows (n,v), lanes (co,u) -- lane dense
    x = x_ref[...]                                            # (N*Wi, Cin*Hi) bf16
    acc = jnp.zeros(o_ref.shape, jnp.float32)                 # (N*Wo, Cblk*Ho)
    for kw in range(K):  # K=5, unrolled; 2 MXU matmuls per step, no slicing
        slab = jnp.dot(bt_ref[kw], x,
                       preferred_element_type=jnp.float32)    # (N*Wo, Cin*Hi)
        acc = acc + jnp.dot(slab.astype(jnp.bfloat16), g_ref[kw],
                            preferred_element_type=jnp.float32)

    # NOTE: conv bias is omitted: training-mode BN subtracts the per-channel
    # batch mean, so a constant per-channel bias cancels exactly.

    # BatchNorm2d training-mode forward, one-pass stats (E[x], E[x^2]) in f32.
    cs = jnp.sum(acc, axis=0, keepdims=True)                  # (1, Cblk*Ho)
    css = jnp.sum(acc * acc, axis=0, keepdims=True)           # (1, Cblk*Ho)
    mu_row = jnp.dot(cs, avg_ref[...],
                     preferred_element_type=jnp.float32)      # per-channel mean
    msq_row = jnp.dot(css, avg_ref[...],
                      preferred_element_type=jnp.float32)     # per-channel E[x^2]
    var_row = msq_row - mu_row * mu_row                       # biased variance
    s_row = gam_ref[...] * jax.lax.rsqrt(var_row + eps)       # (1, Cblk*Ho)
    b_row = bet_ref[...] - mu_row * s_row
    o_ref[...] = (acc * s_row + b_row).astype(o_ref.dtype)


# ----------------------------------------------------------------------------
# wrapper
# ----------------------------------------------------------------------------
def upsample_forward(x_nchw, size, conv_w, conv_b, gamma, beta, eps=1e-5):
    # Training-mode BatchNorm forward (batch statistics) => conv bias cancels.
    del conv_b
    N, Cin, Hi, Wi = x_nchw.shape
    Ho, Wo = size
    Cout, Cin2, K, Kw = conv_w.shape
    assert Cin2 == Cin and K == Kw
    P = K // 2
    Hp, Wp = Ho + 2 * P, Wo + 2 * P
    f32, bf16 = jnp.float32, jnp.bfloat16

    ah = _interp_matrix(Ho, Hi)                                    # (Ho, Hi)
    aw = _interp_matrix(Wo, Wi)                                    # (Wo, Wi)
    ah_pad = jnp.zeros((Hp, Hi), f32).at[P:P + Ho].set(ah)         # zero halo rows
    aw_pad = jnp.zeros((Wp, Wi), f32).at[P:P + Wo].set(aw)

    # Per-kw W-resize matrices with the conv halo + kw lane shift folded in:
    #   A[kw, v, wi] = aw_pad[v + kw, wi];   BT[kw] = blockdiag_N(A[kw])
    A = jnp.stack([aw_pad[kw:kw + Wo] for kw in range(K)], axis=0)     # (K, Wo, Wi)
    eye_n = jnp.eye(N, dtype=f32)
    BT = jnp.stack([jnp.kron(eye_n, A[kw]) for kw in range(K)], axis=0)  # (K, N*Wo, N*Wi)

    # Conv weights with the H-resize + halo + kh shift folded in:
    #   GpT[kw, (c,hi), (co,u)] = sum_kh w[co,c,kh,kw] * ah_pad[u + kh, hi]
    ahw = jnp.stack([ah_pad[kh:kh + Ho] for kh in range(K)], axis=0)   # (K, Ho, Hi)
    gfold = jnp.einsum('ockq,kuh->qchou', conv_w.astype(f32), ahw)     # (K,Cin,Hi,Cout,Ho)
    GpT = gfold.reshape(K, Cin * Hi, Cout * Ho)

    # Input rearranged so rows carry (n, wi) and lanes carry (c, hi).
    x2dT = x_nchw.astype(f32).transpose(0, 3, 1, 2).reshape(N * Wi, Cin * Hi)

    # Channel-block grid ("parallel" axis; megacore-shardable on v7x).
    nblk = 1
    for cand in (2, 4, 8):
        if Cout % cand == 0 and ((Cout // cand) * Ho) % 128 == 0:
            nblk = cand
            break
    Cblk = Cout // nblk
    CbHo = Cblk * Ho
    cnt = float(N * Ho * Wo)

    # Per-channel averaging + broadcast matrix (local channel indices, same for
    # every block):  avg[(c',u'),(c,u)] = (c'==c)/cnt
    avgmat = jnp.kron(jnp.eye(Cblk, dtype=f32), jnp.ones((Ho, Ho), f32)) / cnt
    gamma_row = jnp.repeat(gamma.astype(f32), Ho).reshape(1, Cout * Ho)
    beta_row = jnp.repeat(beta.astype(f32), Ho).reshape(1, Cout * Ho)

    out2d = pl.pallas_call(
        functools.partial(_fused_kernel, K=K, eps=eps),
        out_shape=jax.ShapeDtypeStruct((N * Wo, Cout * Ho), f32),
        grid_spec=pltpu.PrefetchScalarGridSpec(
            num_scalar_prefetch=0,
            grid=(nblk,),
            in_specs=[
                pl.BlockSpec((N * Wi, Cin * Hi), lambda j: (0, 0)),      # x2dT
                pl.BlockSpec((K, N * Wo, N * Wi), lambda j: (0, 0, 0)),  # BT
                pl.BlockSpec((K, Cin * Hi, CbHo), lambda j: (0, 0, j)),  # GpT block
                pl.BlockSpec((1, CbHo), lambda j: (0, j)),               # gamma_row
                pl.BlockSpec((1, CbHo), lambda j: (0, j)),               # beta_row
                pl.BlockSpec((CbHo, CbHo), lambda j: (0, 0)),            # avgmat
            ],
            out_specs=pl.BlockSpec((N * Wo, CbHo), lambda j: (0, j)),
        ),
        compiler_params=pltpu.CompilerParams(
            dimension_semantics=("parallel",)),
    )(x2dT.astype(bf16), BT.astype(bf16), GpT.astype(bf16),
      gamma_row, beta_row, avgmat)

    # Kernel writes a lane-dense (N*Wo, Cout*Ho) slab; cheap NCHW permute here.
    return out2d.reshape(N, Wo, Cout, Ho).transpose(0, 2, 3, 1)


# ----------------------------------------------------------------------------
# pure-JAX reference (includes conv bias to verify it cancels under train BN)
# ----------------------------------------------------------------------------
def upsample_reference(x_nchw, size, conv_w, conv_b, gamma, beta, eps=1e-5):
    N, Cin, Hi, Wi = x_nchw.shape
    Ho, Wo = size
    ah = _interp_matrix(Ho, Hi)
    aw = _interp_matrix(Wo, Wi)
    resized = jnp.einsum('nchw,uh,vw->ncuv', x_nchw.astype(jnp.float32), ah, aw)
    conv = jax.lax.conv_general_dilated(
        resized, conv_w, window_strides=(1, 1), padding=((2, 2), (2, 2)),
        dimension_numbers=('NCHW', 'OIHW', 'NCHW'))
    conv = conv + conv_b[None, :, None, None]
    mu = jnp.mean(conv, axis=(0, 2, 3), keepdims=True)
    var = jnp.mean((conv - mu) ** 2, axis=(0, 2, 3), keepdims=True)
    return (gamma[None, :, None, None] * (conv - mu) * jax.lax.rsqrt(var + eps)
            + beta[None, :, None, None])


if __name__ == "__main__":
    key = jax.random.PRNGKey(0)
    k_x, k_w, k_b, k_g, k_bt = jax.random.split(key, 5)

    inplanes, planes = 4, 8
    N, Hi, Wi = 2, 16, 16
    size = (32, 32)

    x = jax.random.normal(k_x, (N, inplanes, Hi, Wi), dtype=jnp.float32)
    conv_w = 0.1 * jax.random.normal(k_w, (planes, inplanes, 5, 5), dtype=jnp.float32)
    conv_b = 0.1 * jax.random.normal(k_b, (planes,), dtype=jnp.float32)
    gamma = 1.0 + 0.1 * jax.random.normal(k_g, (planes,), dtype=jnp.float32)
    beta = 0.1 * jax.random.normal(k_bt, (planes,), dtype=jnp.float32)

    out = upsample_forward(x, size, conv_w, conv_b, gamma, beta)
    out = jax.block_until_ready(out)

    ref = upsample_reference(x, size, conv_w, conv_b, gamma, beta)
    ref = jax.block_until_ready(ref)

    assert out.shape == (N, planes, size[0], size[1]), out.shape
    # bf16 matmul operands (f32 accumulation) => slightly looser tolerance.
    assert jnp.allclose(out, ref, atol=2e-2, rtol=2e-2), \
        float(jnp.max(jnp.abs(out - ref)))

    print("KERNEL_OK")
</pallas_src>

<mosaic_0001>
module attributes {stable_mosaic.version = 11 : i64} {
  func.func @_fused_kernel(%arg0: i32, %arg1: memref<32x64xbf16, #tpu.memory_space<vmem>>, %arg2: memref<5x64x32xbf16, #tpu.memory_space<vmem>>, %arg3: memref<5x64x128xbf16, #tpu.memory_space<vmem>>, %arg4: memref<1x128xf32, #tpu.memory_space<vmem>>, %arg5: memref<1x128xf32, #tpu.memory_space<vmem>>, %arg6: memref<128x128xf32, #tpu.memory_space<vmem>>, %arg7: memref<64x128xf32, #tpu.memory_space<vmem>>) attributes {dimension_semantics = [#tpu.dimension_semantics<parallel>], iteration_bounds = array<i64: 2>, scalar_prefetch = 0 : i64, scratch_operands = 0 : i64, tpu.core_type = #tpu.core_type<tc>, window_params = [{pipeline_mode = #tpu.pipeline_mode<synchronous>, transform_indices = @transform_0, window_bounds = array<i64: 32, 64>}, {pipeline_mode = #tpu.pipeline_mode<synchronous>, transform_indices = @transform_1, window_bounds = array<i64: 5, 64, 32>}, {transform_indices = @transform_2, window_bounds = array<i64: 5, 64, 128>}, {transform_indices = @transform_3, window_bounds = array<i64: 1, 128>}, {transform_indices = @transform_4, window_bounds = array<i64: 1, 128>}, {pipeline_mode = #tpu.pipeline_mode<synchronous>, transform_indices = @transform_5, window_bounds = array<i64: 128, 128>}, {transform_indices = @transform_6, window_bounds = array<i64: 64, 128>}]} {
    %c0 = arith.constant 0 : index
    %c0_0 = arith.constant 0 : index
    %0 = vector.load %arg1[%c0, %c0_0] : memref<32x64xbf16, #tpu.memory_space<vmem>>, vector<32x64xbf16>
    %cst = arith.constant 0.000000e+00 : f32
    %1 = vector.broadcast %cst : f32 to vector<64x128xf32>
    %c0_1 = arith.constant 0 : index
    %c0_2 = arith.constant 0 : index
    %c0_3 = arith.constant 0 : index
    %2 = vector.load %arg2[%c0_1, %c0_2, %c0_3] : memref<5x64x32xbf16, #tpu.memory_space<vmem>>, vector<1x64x32xbf16>
    %3 = vector.shape_cast %2 : vector<1x64x32xbf16> to vector<64x32xbf16>
    %cst_4 = arith.constant dense<0.000000e+00> : vector<64x64xf32>
    %4 = tpu.matmul %3, %0, %cst_4 {dimension_numbers = #tpu.dot_dimension_numbers<[1], [0], [0], [1], [0, 0, 1, 1], [], []>} : vector<64x32xbf16>, vector<32x64xbf16>, vector<64x64xf32> -> vector<64x64xf32>
    %5 = arith.truncf %4 : vector<64x64xf32> to vector<64x64xbf16>
    %c0_5 = arith.constant 0 : index
    %c0_6 = arith.constant 0 : index
    %c0_7 = arith.constant 0 : index
    %6 = vector.load %arg3[%c0_5, %c0_6, %c0_7] : memref<5x64x128xbf16, #tpu.memory_space<vmem>>, vector<1x64x128xbf16>
    %7 = vector.shape_cast %6 : vector<1x64x128xbf16> to vector<64x128xbf16>
    %cst_8 = arith.constant dense<0.000000e+00> : vector<64x128xf32>
    %8 = tpu.matmul %5, %7, %cst_8 {dimension_numbers = #tpu.dot_dimension_numbers<[1], [0], [0], [1], [0, 0, 1, 1], [], []>} : vector<64x64xbf16>, vector<64x128xbf16>, vector<64x128xf32> -> vector<64x128xf32>
    %9 = arith.addf %1, %8 : vector<64x128xf32>
    %c1 = arith.constant 1 : index
    %c0_9 = arith.constant 0 : index
    %c0_10 = arith.constant 0 : index
    %10 = vector.load %arg2[%c1, %c0_9, %c0_10] : memref<5x64x32xbf16, #tpu.memory_space<vmem>>, vector<1x64x32xbf16>
    %11 = vector.shape_cast %10 : vector<1x64x32xbf16> to vector<64x32xbf16>
    %cst_11 = arith.constant dense<0.000000e+00> : vector<64x64xf32>
    %12 = tpu.matmul %11, %0, %cst_11 {dimension_numbers = #tpu.dot_dimension_numbers<[1], [0], [0], [1], [0, 0, 1, 1], [], []>} : vector<64x32xbf16>, vector<32x64xbf16>, vector<64x64xf32> -> vector<64x64xf32>
    %13 = arith.truncf %12 : vector<64x64xf32> to vector<64x64xbf16>
    %c1_12 = arith.constant 1 : index
    %c0_13 = arith.constant 0 : index
    %c0_14 = arith.constant 0 : index
    %14 = vector.load %arg3[%c1_12, %c0_13, %c0_14] : memref<5x64x128xbf16, #tpu.memory_space<vmem>>, vector<1x64x128xbf16>
    %15 = vector.shape_cast %14 : vector<1x64x128xbf16> to vector<64x128xbf16>
    %cst_15 = arith.constant dense<0.000000e+00> : vector<64x128xf32>
    %16 = tpu.matmul %13, %15, %cst_15 {dimension_numbers = #tpu.dot_dimension_numbers<[1], [0], [0], [1], [0, 0, 1, 1], [], []>} : vector<64x64xbf16>, vector<64x128xbf16>, vector<64x128xf32> -> vector<64x128xf32>
    %17 = arith.addf %9, %16 : vector<64x128xf32>
    %c2 = arith.constant 2 : index
    %c0_16 = arith.constant 0 : index
    %c0_17 = arith.constant 0 : index
    %18 = vector.load %arg2[%c2, %c0_16, %c0_17] : memref<5x64x32xbf16, #tpu.memory_space<vmem>>, vector<1x64x32xbf16>
    %19 = vector.shape_cast %18 : vector<1x64x32xbf16> to vector<64x32xbf16>
    %cst_18 = arith.constant dense<0.000000e+00> : vector<64x64xf32>
    %20 = tpu.matmul %19, %0, %cst_18 {dimension_numbers = #tpu.dot_dimension_numbers<[1], [0], [0], [1], [0, 0, 1, 1], [], []>} : vector<64x32xbf16>, vector<32x64xbf16>, vector<64x64xf32> -> vector<64x64xf32>
    %21 = arith.truncf %20 : vector<64x64xf32> to vector<64x64xbf16>
    %c2_19 = arith.constant 2 : index
    %c0_20 = arith.constant 0 : index
    %c0_21 = arith.constant 0 : index
    %22 = vector.load %arg3[%c2_19, %c0_20, %c0_21] : memref<5x64x128xbf16, #tpu.memory_space<vmem>>, vector<1x64x128xbf16>
    %23 = vector.shape_cast %22 : vector<1x64x128xbf16> to vector<64x128xbf16>
    %cst_22 = arith.constant dense<0.000000e+00> : vector<64x128xf32>
    %24 = tpu.matmul %21, %23, %cst_22 {dimension_numbers = #tpu.dot_dimension_numbers<[1], [0], [0], [1], [0, 0, 1, 1], [], []>} : vector<64x64xbf16>, vector<64x128xbf16>, vector<64x128xf32> -> vector<64x128xf32>
    %25 = arith.addf %17, %24 : vector<64x128xf32>
    %c3 = arith.constant 3 : index
    %c0_23 = arith.constant 0 : index
    %c0_24 = arith.constant 0 : index
    %26 = vector.load %arg2[%c3, %c0_23, %c0_24] : memref<5x64x32xbf16, #tpu.memory_space<vmem>>, vector<1x64x32xbf16>
    %27 = vector.shape_cast %26 : vector<1x64x32xbf16> to vector<64x32xbf16>
    %cst_25 = arith.constant dense<0.000000e+00> : vector<64x64xf32>
    %28 = tpu.matmul %27, %0, %cst_25 {dimension_numbers = #tpu.dot_dimension_numbers<[1], [0], [0], [1], [0, 0, 1, 1], [], []>} : vector<64x32xbf16>, vector<32x64xbf16>, vector<64x64xf32> -> vector<64x64xf32>
    %29 = arith.truncf %28 : vector<64x64xf32> to vector<64x64xbf16>
    %c3_26 = arith.constant 3 : index
    %c0_27 = arith.constant 0 : index
    %c0_28 = arith.constant 0 : index
    %30 = vector.load %arg3[%c3_26, %c0_27, %c0_28] : memref<5x64x128xbf16, #tpu.memory_space<vmem>>, vector<1x64x128xbf16>
    %31 = vector.shape_cast %30 : vector<1x64x128xbf16> to vector<64x128xbf16>
    %cst_29 = arith.constant dense<0.000000e+00> : vector<64x128xf32>
    %32 = tpu.matmul %29, %31, %cst_29 {dimension_numbers = #tpu.dot_dimension_numbers<[1], [0], [0], [1], [0, 0, 1, 1], [], []>} : vector<64x64xbf16>, vector<64x128xbf16>, vector<64x128xf32> -> vector<64x128xf32>
    %33 = arith.addf %25, %32 : vector<64x128xf32>
    %c4 = arith.constant 4 : index
    %c0_30 = arith.constant 0 : index
    %c0_31 = arith.constant 0 : index
    %34 = vector.load %arg2[%c4, %c0_30, %c0_31] : memref<5x64x32xbf16, #tpu.memory_space<vmem>>, vector<1x64x32xbf16>
    %35 = vector.shape_cast %34 : vector<1x64x32xbf16> to vector<64x32xbf16>
    %cst_32 = arith.constant dense<0.000000e+00> : vector<64x64xf32>
    %36 = tpu.matmul %35, %0, %cst_32 {dimension_numbers = #tpu.dot_dimension_numbers<[1], [0], [0], [1], [0, 0, 1, 1], [], []>} : vector<64x32xbf16>, vector<32x64xbf16>, vector<64x64xf32> -> vector<64x64xf32>
    %37 = arith.truncf %36 : vector<64x64xf32> to vector<64x64xbf16>
    %c4_33 = arith.constant 4 : index
    %c0_34 = arith.constant 0 : index
    %c0_35 = arith.constant 0 : index
    %38 = vector.load %arg3[%c4_33, %c0_34, %c0_35] : memref<5x64x128xbf16, #tpu.memory_space<vmem>>, vector<1x64x128xbf16>
    %39 = vector.shape_cast %38 : vector<1x64x128xbf16> to vector<64x128xbf16>
    %cst_36 = arith.constant dense<0.000000e+00> : vector<64x128xf32>
    %40 = tpu.matmul %37, %39, %cst_36 {dimension_numbers = #tpu.dot_dimension_numbers<[1], [0], [0], [1], [0, 0, 1, 1], [], []>} : vector<64x64xbf16>, vector<64x128xbf16>, vector<64x128xf32> -> vector<64x128xf32>
    %41 = arith.addf %33, %40 : vector<64x128xf32>
    %cst_37 = arith.constant dense<0.000000e+00> : vector<128xf32>
    %42 = vector.multi_reduction <add>, %41, %cst_37 [0] : vector<64x128xf32> to vector<128xf32>
    %43 = vector.shape_cast %42 : vector<128xf32> to vector<1x128xf32>
    %44 = arith.mulf %41, %41 : vector<64x128xf32>
    %cst_38 = arith.constant dense<0.000000e+00> : vector<128xf32>
    %45 = vector.multi_reduction <add>, %44, %cst_38 [0] : vector<64x128xf32> to vector<128xf32>
    %46 = vector.shape_cast %45 : vector<128xf32> to vector<1x128xf32>
    %c0_39 = arith.constant 0 : index
    %c0_40 = arith.constant 0 : index
    %47 = vector.load %arg6[%c0_39, %c0_40] : memref<128x128xf32, #tpu.memory_space<vmem>>, vector<128x128xf32>
    %cst_41 = arith.constant dense<0.000000e+00> : vector<1x128xf32>
    %48 = tpu.matmul %43, %47, %cst_41 {dimension_numbers = #tpu.dot_dimension_numbers<[1], [0], [0], [1], [0, 0, 1, 1], [], []>} : vector<1x128xf32>, vector<128x128xf32>, vector<1x128xf32> -> vector<1x128xf32>
    %c0_42 = arith.constant 0 : index
    %c0_43 = arith.constant 0 : index
    %49 = vector.load %arg6[%c0_42, %c0_43] : memref<128x128xf32, #tpu.memory_space<vmem>>, vector<128x128xf32>
    %cst_44 = arith.constant dense<0.000000e+00> : vector<1x128xf32>
    %50 = tpu.matmul %46, %49, %cst_44 {dimension_numbers = #tpu.dot_dimension_numbers<[1], [0], [0], [1], [0, 0, 1, 1], [], []>} : vector<1x128xf32>, vector<128x128xf32>, vector<1x128xf32> -> vector<1x128xf32>
    %51 = arith.mulf %48, %48 : vector<1x128xf32>
    %52 = arith.subf %50, %51 : vector<1x128xf32>
    %c0_45 = arith.constant 0 : index
    %c0_46 = arith.constant 0 : index
    %53 = vector.load %arg4[%c0_45, %c0_46] : memref<1x128xf32, #tpu.memory_space<vmem>>, vector<1x128xf32>
    %cst_47 = arith.constant 9.99999974E-6 : f32
    %54 = vector.broadcast %cst_47 : f32 to vector<1x128xf32>
    %55 = arith.addf %52, %54 : vector<1x128xf32>
    %56 = math.rsqrt %55 : vector<1x128xf32>
    %57 = arith.mulf %53, %56 : vector<1x128xf32>
    %c0_48 = arith.constant 0 : index
    %c0_49 = arith.constant 0 : index
    %58 = vector.load %arg5[%c0_48, %c0_49] : memref<1x128xf32, #tpu.memory_space<vmem>>, vector<1x128xf32>
    %59 = arith.mulf %48, %57 : vector<1x128xf32>
    %60 = arith.subf %58, %59 : vector<1x128xf32>
    %61 = vector.broadcast %57 : vector<1x128xf32> to vector<64x128xf32>
    %62 = arith.mulf %41, %61 : vector<64x128xf32>
    %63 = vector.broadcast %60 : vector<1x128xf32> to vector<64x128xf32>
    %64 = arith.addf %62, %63 : vector<64x128xf32>
    %c0_50 = arith.constant 0 : index
    %c0_51 = arith.constant 0 : index
    %65 = vector.load %arg7[%c0_50, %c0_51] : memref<64x128xf32, #tpu.memory_space<vmem>>, vector<64x128xf32>
    tpu.vector_store %arg7[%c0_50, %c0_51], %64 {strides = array<i32>} : memref<64x128xf32, #tpu.memory_space<vmem>>, vector<64x128xf32>,
    return
  }
  func.func @transform_0(%arg0: i32) -> (i32, i32) {
    %c0_i32 = arith.constant 0 : i32
    %c0_i32_0 = arith.constant 0 : i32
    %c0_i32_1 = arith.constant 0 : i32
    return %c0_i32, %c0_i32_0 : i32, i32
  }
  func.func @transform_1(%arg0: i32) -> (i32, i32, i32) {
    %c0_i32 = arith.constant 0 : i32
    %c0_i32_0 = arith.constant 0 : i32
    %c0_i32_1 = arith.constant 0 : i32
    %c0_i32_2 = arith.constant 0 : i32
    return %c0_i32, %c0_i32_0, %c0_i32_1 : i32, i32, i32
  }
  func.func @transform_2(%arg0: i32) -> (i32, i32, i32) {
    %c0_i32 = arith.constant 0 : i32
    %c0_i32_0 = arith.constant 0 : i32
    %c0_i32_1 = arith.constant 0 : i32
    return %c0_i32, %c0_i32_0, %arg0 : i32, i32, i32
  }
  func.func @transform_3(%arg0: i32) -> (i32, i32) {
    %c0_i32 = arith.constant 0 : i32
    %c0_i32_0 = arith.constant 0 : i32
    return %c0_i32, %arg0 : i32, i32
  }
  func.func @transform_4(%arg0: i32) -> (i32, i32) {
    %c0_i32 = arith.constant 0 : i32
    %c0_i32_0 = arith.constant 0 : i32
    return %c0_i32, %arg0 : i32, i32
  }
  func.func @transform_5(%arg0: i32) -> (i32, i32) {
    %c0_i32 = arith.constant 0 : i32
    %c0_i32_0 = arith.constant 0 : i32
    %c0_i32_1 = arith.constant 0 : i32
    return %c0_i32, %c0_i32_0 : i32, i32
  }
  func.func @transform_6(%arg0: i32) -> (i32, i32) {
    %c0_i32 = arith.constant 0 : i32
    %c0_i32_0 = arith.constant 0 : i32
    return %c0_i32, %arg0 : i32, i32
  }
}

</mosaic_0001>

<llo_original>
// kernel: tpu_custom_call.1
$region0: #{tpu_custom_call.1}
  #allocation0 [shape = 'u32[]', space=smem, size = 0x4, offset = 0x4, fixed_abs, tag = 'smem constant byte address 0x4 - core index']
  #allocation1 [shape = 'u32[144,128]{1,0:T(1,128)}', space=vmem, size = 0x12000, scoped, tag = 'internal scratch']
  %s0 = inlined_call_operand.vmem [shape: bf16[32,64], index: 0, kind: input, shape index: {}]
  %s1 = inlined_call_operand.vmem [shape: bf16[5,64,32], index: 1, kind: input, shape index: {}]
  %s2 = inlined_call_operand.hbm [shape: bf16[5,64,256], index: 2, kind: input, shape index: {}]
  %s3 = inlined_call_operand.vmem [shape: f32[1,256], index: 3, kind: input, shape index: {}]
  %s4 = inlined_call_operand.vmem [shape: f32[1,256], index: 4, kind: input, shape index: {}]
  %s5 = inlined_call_operand.vmem [shape: f32[128,128], index: 5, kind: input, shape index: {}]
  %s6 = inlined_call_operand.hbm [shape: f32[64,256], index: 6, kind: output, shape index: {}]
  %s7 = sld [smem:[#allocation0]]
  $region61: #{tpu_custom_call.1} parent=0
    _
  %s9 = ssub.s32 1, %s7
  %s10 = scalar_select 0, %s9, %s7
  $region1: #{tpu_custom_call.1} parent=0
    #allocation2 [shape = 'u8[163840]{0}', space=vmem, size = 0x28000, scoped, tag = 'input window, operand 2']
    #allocation3 [shape = 's32[2]{0}', space=sflag, size = 0x8, scoped, tag = 'scoped memory for tpu_custom_call.1']
    #allocation4 [shape = 's32[2]{0}', space=sflag, size = 0x8, scoped, tag = 'scoped memory for tpu_custom_call.1']
    #allocation5 [shape = 'u8[65536]{0}', space=vmem, size = 0x10000, scoped, tag = 'output window, operand 0']
    %11 = vsyncpa [#allocation3], 0
    %s12 = scalar_lea.sflag [#allocation3], 1
    %13 = vsyncpa %s12, 0
    %14 = vsyncpa [#allocation4], 0
    %s15 = scalar_lea.sflag [#allocation4], 1
    %16 = vsyncpa %s15, 0
    loop: start=0, step=1, limit=4
    $region2: #{tpu_custom_call.1} parent=1 // loop_pre_header
      _
    $region3: #{tpu_custom_call.1} parent=1 // loop_header
      %s18 = sphi 0, %s22
      %p19 = scmp.ge.s32.totalorder %s18, 4
      %s26 = sphi 0, %s26
      %s28 = sphi 0, %s26
      %s29 = sphi 0, %s28
      %s43 = sphi 0, %s29
      %s47 = sphi 0, %s47
      %s49 = sphi 0, %s47
      %s50 = sphi 0, %s49
      %s64 = sphi 0, %s50
      %s70 = sphi 0, %s72
      %s73 = sphi 0, %s70
      %s74 = sphi 0, %s73
      %s90 = sphi 0, %s74
      %s96 = sphi 0, %s98
      %s99 = sphi 0, %s96
      %s100 = sphi 0, %s99
      %s116 = sphi 0, %s100
      %s122 = sphi 0, %s124
      %s125 = sphi 0, %s122
      %s126 = sphi 0, %s125
      %s142 = sphi 0, %s126
      %s146 = sphi 0, %s146
      %s148 = sphi 0, %s146
      %s149 = sphi 0, %s148
      %s163 = sphi 0, %s149
      %s169 = sphi 0, %s171
      %s172 = sphi 0, %s169
      %s173 = sphi 0, %s172
      %s189 = sphi 0, %s173
    $region4: #{tpu_custom_call.1} parent=1 // loop_header_branch
      %21 = sbr.rel (%p19) target = $region8
    $region5: #{tpu_custom_call.1} parent=1 // loop_body
      %s23 = ssub.s32 %s18, 1
      %s24 = ssub.s32 %s18, 2
      %s25 = sadd.s32 %s18, 1
      %s27 = sadd.s32 %s26, 1
      %p30 = scmp.eq.s32.totalorder %s18, 1
      %p31 = scmp.ne.s32.totalorder %s26, %s28
      %p32 = scmp.eq.s32.totalorder %s18, 0
      %p33 = por %p31, %p32
      %p34 = scmp.ne.s32.totalorder %s26, %s28
      %p35 = scmp.eq.s32.totalorder %s23, 1
      %p36 = por %p34, %p35
      %p37 = scmp.ne.s32.totalorder %s28, %s29
      %p38 = scmp.eq.s32.totalorder %s23, 0
      %p39 = por %p37, %p38
      %p40 = scmp.ne.s32.totalorder %s28, %s29
      %p41 = scmp.eq.s32.totalorder %s24, 1
      %p42 = por %p40, %p41
      %p44 = scmp.ne.s32.totalorder %s29, %s43
      %p45 = scmp.eq.s32.totalorder %s24, 0
      %p46 = por %p44, %p45
      %s48 = sadd.s32 %s47, 1
      %p51 = scmp.eq.s32.totalorder %s18, 1
      %p52 = scmp.ne.s32.totalorder %s47, %s49
      %p53 = scmp.eq.s32.totalorder %s18, 0
      %p54 = por %p52, %p53
      %p55 = scmp.ne.s32.totalorder %s47, %s49
      %p56 = scmp.eq.s32.totalorder %s23, 1
      %p57 = por %p55, %p56
      %p58 = scmp.ne.s32.totalorder %s49, %s50
      %p59 = scmp.eq.s32.totalorder %s23, 0
      %p60 = por %p58, %p59
      %p61 = scmp.ne.s32.totalorder %s49, %s50
      %p62 = scmp.eq.s32.totalorder %s24, 1
      %p63 = por %p61, %p62
      %p65 = scmp.ne.s32.totalorder %s50, %s64
      %p66 = scmp.eq.s32.totalorder %s24, 0
      %p67 = por %p65, %p66
      %s68 = ssub.s32 %s18, %s25
      %p69 = scmp.eq.s32.totalorder %s68, 0
      %s71 = sadd.s32 %s70, 1
      %s72 = scalar_select %p69, %s70, %s71
      %p75 = pneg %p69
      %p76 = scmp.eq.s32.totalorder %s18, 1
      %p77 = por %p75, %p76
      %p78 = scmp.ne.s32.totalorder %s70, %s73
      %p79 = scmp.eq.s32.totalorder %s18, 0
      %p80 = por %p78, %p79
      %p81 = scmp.ne.s32.totalorder %s70, %s73
      %p82 = scmp.eq.s32.totalorder %s23, 1
      %p83 = por %p81, %p82
      %p84 = scmp.ne.s32.totalorder %s73, %s74
      %p85 = scmp.eq.s32.totalorder %s23, 0
      %p86 = por %p84, %p85
      %p87 = scmp.ne.s32.totalorder %s73, %s74
      %p88 = scmp.eq.s32.totalorder %s24, 1
      %p89 = por %p87, %p88
      %p91 = scmp.ne.s32.totalorder %s74, %s90
      %p92 = scmp.eq.s32.totalorder %s24, 0
      %p93 = por %p91, %p92
      %s94 = ssub.s32 %s18, %s25
      %p95 = scmp.eq.s32.totalorder %s94, 0
      %s97 = sadd.s32 %s96, 1
      %s98 = scalar_select %p95, %s96, %s97
      %p101 = pneg %p95
      %p102 = scmp.eq.s32.totalorder %s18, 1
      %p103 = por %p101, %p102
      %p104 = scmp.ne.s32.totalorder %s96, %s99
      %p105 = scmp.eq.s32.totalorder %s18, 0
      %p106 = por %p104, %p105
      %p107 = scmp.ne.s32.totalorder %s96, %s99
      %p108 = scmp.eq.s32.totalorder %s23, 1
      %p109 = por %p107, %p108
      %p110 = scmp.ne.s32.totalorder %s99, %s100
      %p111 = scmp.eq.s32.totalorder %s23, 0
      %p112 = por %p110, %p111
      %p113 = scmp.ne.s32.totalorder %s99, %s100
      %p114 = scmp.eq.s32.totalorder %s24, 1
      %p115 = por %p113, %p114
      %p117 = scmp.ne.s32.totalorder %s100, %s116
      %p118 = scmp.eq.s32.totalorder %s24, 0
      %p119 = por %p117, %p118
      %s120 = ssub.s32 %s18, %s25
      %p121 = scmp.eq.s32.totalorder %s120, 0
      %s123 = sadd.s32 %s122, 1
      %s124 = scalar_select %p121, %s122, %s123
      %p127 = pneg %p121
      %p128 = scmp.eq.s32.totalorder %s18, 1
      %p129 = por %p127, %p128
      %p130 = scmp.ne.s32.totalorder %s122, %s125
      %p131 = scmp.eq.s32.totalorder %s18, 0
      %p132 = por %p130, %p131
      %p133 = scmp.ne.s32.totalorder %s122, %s125
      %p134 = scmp.eq.s32.totalorder %s23, 1
      %p135 = por %p133, %p134
      %p136 = scmp.ne.s32.totalorder %s125, %s126
      %p137 = scmp.eq.s32.totalorder %s23, 0
      %p138 = por %p136, %p137
      %p139 = scmp.ne.s32.totalorder %s125, %s126
      %p140 = scmp.eq.s32.totalorder %s24, 1
      %p141 = por %p139, %p140
      %p143 = scmp.ne.s32.totalorder %s126, %s142
      %p144 = scmp.eq.s32.totalorder %s24, 0
      %p145 = por %p143, %p144
      %s147 = sadd.s32 %s146, 1
      %p150 = scmp.eq.s32.totalorder %s18, 1
      %p151 = scmp.ne.s32.totalorder %s146, %s148
      %p152 = scmp.eq.s32.totalorder %s18, 0
      %p153 = por %p151, %p152
      %p154 = scmp.ne.s32.totalorder %s146, %s148
      %p155 = scmp.eq.s32.totalorder %s23, 1
      %p156 = por %p154, %p155
      %p157 = scmp.ne.s32.totalorder %s148, %s149
      %p158 = scmp.eq.s32.totalorder %s23, 0
      %p159 = por %p157, %p158
      %p160 = scmp.ne.s32.totalorder %s148, %s149
      %p161 = scmp.eq.s32.totalorder %s24, 1
      %p162 = por %p160, %p161
      %p164 = scmp.ne.s32.totalorder %s149, %s163
      %p165 = scmp.eq.s32.totalorder %s24, 0
      %p166 = por %p164, %p165
      %s167 = ssub.s32 %s18, %s25
      %p168 = scmp.eq.s32.totalorder %s167, 0
      %s170 = sadd.s32 %s169, 1
      %s171 = scalar_select %p168, %s169, %s170
      %p174 = pneg %p168
      %p175 = scmp.eq.s32.totalorder %s18, 1
      %p176 = por %p174, %p175
      %p177 = scmp.ne.s32.totalorder %s169, %s172
      %p178 = scmp.eq.s32.totalorder %s18, 0
      %p179 = por %p177, %p178
      %p180 = scmp.ne.s32.totalorder %s169, %s172
      %p181 = scmp.eq.s32.totalorder %s23, 1
      %p182 = por %p180, %p181
      %p183 = scmp.ne.s32.totalorder %s172, %s173
      %p184 = scmp.eq.s32.totalorder %s23, 0
      %p185 = por %p183, %p184
      %p186 = scmp.ne.s32.totalorder %s172, %s173
      %p187 = scmp.eq.s32.totalorder %s24, 1
      %p188 = por %p186, %p187
      %p190 = scmp.ne.s32.totalorder %s173, %s189
      %p191 = scmp.eq.s32.totalorder %s24, 0
      %p192 = por %p190, %p191
      %p193 = scmp.le.s32.totalorder 1, %s18
      %p194 = scmp.lt.s32.totalorder %s18, 3
      %p195 = pnand %p193, %p194
      %p196 = pneg %p195
      // Predicated region
      $region9: #{tpu_custom_call.1} parent=5 // pred_check
        _
      $region10: #{tpu_custom_call.1} parent=5 // pred_check_branch
        %198 = sbr.rel (%p195) target = $region12
      $region11: #{tpu_custom_call.1} parent=5 // pred_region
        %s199 = ssub.s32 %s18, 1
        // Predicated region
        $region13: #{tpu_custom_call.1} parent=11 // pred_check
          %p200 = pneg %p39
        $region14: #{tpu_custom_call.1} parent=11 // pred_check_branch
          %202 = sbr.rel (%p200) target = $region16
        $region15: #{tpu_custom_call.1} parent=11 // pred_region
          _
        $region16: #{tpu_custom_call.1} parent=11 // pred_fallthru
          _
        // Predicated region
        $region17: #{tpu_custom_call.1} parent=11 // pred_check
          %p203 = pneg %p60
        $region18: #{tpu_custom_call.1} parent=11 // pred_check_branch
          %205 = sbr.rel (%p203) target = $region20
        $region19: #{tpu_custom_call.1} parent=11 // pred_region
          _
        $region20: #{tpu_custom_call.1} parent=11 // pred_fallthru
          _
        // Predicated region
        $region21: #{tpu_custom_call.1} parent=11 // pred_check
          %p206 = pneg %p159
        $region22: #{tpu_custom_call.1} parent=11 // pred_check_branch
          %208 = sbr.rel (%p206) target = $region24
        $region23: #{tpu_custom_call.1} parent=11 // pred_region
          _
        $region24: #{tpu_custom_call.1} parent=11 // pred_fallthru
          _
      $region12: #{tpu_custom_call.1} parent=5 // pred_fallthru
        _
      %p209 = scmp.lt.s32.totalorder %s18, 2
      // Predicated region
      $region25: #{tpu_custom_call.1} parent=5 // pred_check
        %p210 = pneg %p209
      $region26: #{tpu_custom_call.1} parent=5 // pred_check_branch
        %212 = sbr.rel (%p210) target = $region28
      $region27: #{tpu_custom_call.1} parent=5 // pred_region
        // Predicated region
        $region29: #{tpu_custom_call.1} parent=27 // pred_check
          %p213 = pneg %p80
        $region30: #{tpu_custom_call.1} parent=27 // pred_check_branch
          %215 = sbr.rel (%p213) target = $region32
        $region31: #{tpu_custom_call.1} parent=27 // pred_region
          %s216 = sand.u32 %s70, 1
          %s217 = scalar_lea.sflag [#allocation3], %s216
          %s218 = sand.u32 %s70, 1
          %s219 = smul.addr %s218, 160
          %s220 = scalar_lea.vmem [#allocation2], %s219
          %s222 = ssub.s32 2560, 2560
          %223 = vsyncadd %s217, %s222
          %s224 = smul.addr %s18, 64
          %s225 = scalar_lea.hbm %s2, %s224
          %s226 = sshll.u32 %s220, 4
          %s227 = int_to_ptr.vmem [resolvable:$true] %s226
          %232 = dma.hbm_to_vmem [thread:$0]  %s225, 2560, %s227, %s217, 128, 64, 4
        $region32: #{tpu_custom_call.1} parent=27 // pred_fallthru
          _
        // Predicated region
        $region33: #{tpu_custom_call.1} parent=27 // pred_check
          %p233 = pneg %p106
        $region34: #{tpu_custom_call.1} parent=27 // pred_check_branch
          %235 = sbr.rel (%p233) target = $region36
        $region35: #{tpu_custom_call.1} parent=27 // pred_region
          %p236 = scmp.lt.s32.totalorder %s18, 1
          %s237 = scalar_select %p236, %s18, 1
          %s238 = scalar_lea.vmem %s3, %s237
        $region36: #{tpu_custom_call.1} parent=27 // pred_fallthru
          _
        // Predicated region
        $region37: #{tpu_custom_call.1} parent=27 // pred_check
          %p239 = pneg %p132
        $region38: #{tpu_custom_call.1} parent=27 // pred_check_branch
          %241 = sbr.rel (%p239) target = $region40
        $region39: #{tpu_custom_call.1} parent=27 // pred_region
          %p242 = scmp.lt.s32.totalorder %s18, 1
          %s243 = scalar_select %p242, %s18, 1
          %s244 = scalar_lea.vmem %s4, %s243
        $region40: #{tpu_custom_call.1} parent=27 // pred_fallthru
          _
      $region28: #{tpu_custom_call.1} parent=5 // pred_fallthru
        _
      %p245 = scmp.le.s32.totalorder 1, %s18
      %p246 = scmp.lt.s32.totalorder %s18, 3
      %p247 = pnand %p245, %p246
      %p248 = pneg %p247
      // Predicated region
      $region41: #{tpu_custom_call.1} parent=5 // pred_check
        _
      $region42: #{tpu_custom_call.1} parent=5 // pred_check_branch
        %250 = sbr.rel (%p247) target = $region44
      $region43: #{tpu_custom_call.1} parent=5 // pred_region
        %s251 = ssub.s32 %s18, 1
        %s252 = sand.u32 %s73, 1
        %s253 = scalar_lea.sflag [#allocation3], %s252
        %s254 = sand.u32 %s73, 1
        %s255 = smul.addr %s254, 160
        %s256 = scalar_lea.vmem [#allocation2], %s255
        // Predicated region
        $region45: #{tpu_custom_call.1} parent=43 // pred_check
          %p257 = pneg %p86
        $region46: #{tpu_custom_call.1} parent=43 // pred_check_branch
          %259 = sbr.rel (%p257) target = $region48
        $region47: #{tpu_custom_call.1} parent=43 // pred_region
          %260 = dma.done %s253, 2560
        $region48: #{tpu_custom_call.1} parent=43 // pred_fallthru
          _
        %p261 = pneg %p39
        %p262 = pneg %p36
        %p263 = pneg %p60
        %p264 = pneg %p57
        %s265 = sand.u32 %s73, 1
        %s266 = scalar_lea.sflag [#allocation3], %s265
        %s267 = sand.u32 %s73, 1
        %s268 = smul.addr %s267, 160
        %s269 = scalar_lea.vmem [#allocation2], %s268
        %p270 = pneg %p86
        %p271 = pneg %p83
        %p272 = scmp.lt.s32.totalorder %s23, 1
        %s273 = scalar_select %p272, %s23, 1
        %s274 = scalar_lea.vmem %s3, %s273
        %p275 = pneg %p112
        %p276 = pneg %p109
        %p277 = scmp.lt.s32.totalorder %s23, 1
        %s278 = scalar_select %p277, %s23, 1
        %s279 = scalar_lea.vmem %s4, %s278
        %p280 = pneg %p138
        %p281 = pneg %p135
        %p282 = pneg %p159
        %p283 = pneg %p156
        %p284 = pneg %p185
        %p285 = pneg %p182
        %s286 = sand.u32 %s172, 1
        %s287 = scalar_lea.sflag [#allocation4], %s286
        %s288 = sand.u32 %s172, 1
        %s289 = smul.addr %s288, 64
        %s290 = scalar_lea.vmem [#allocation5], %s289
        %p291 = scmp.lt.s32.totalorder %s23, 1
        %s292 = scalar_select %p291, %s23, 1
        %s293 = scalar_lea.vmem %s3, %s292
        %p294 = scmp.lt.s32.totalorder %s23, 1
        %s295 = scalar_select %p294, %s23, 1
        %s296 = scalar_lea.vmem %s4, %s295
        %v298 = vld [vmem:[%s0] sm:$0xf]
        %v299 = vld [vmem:[%s0 + $0x4] sm:$0xf]
        %v300 = vld [vmem:[%s0 + $0x8] sm:$0xf]
        %v301 = vld [vmem:[%s0 + $0xc] sm:$0xf]
        %v302 = vld [vmem:[%s1] sm:$0xf]
        %v303 = vld [vmem:[%s1 + $0x4] sm:$0xf]
        %v304 = vld [vmem:[%s1 + $0x8] sm:$0xf]
        %v305 = vld [vmem:[%s1 + $0xc] sm:$0xf]
        %v306 = vld [vmem:[%s1 + $0x10] sm:$0xf]
        %v307 = vld [vmem:[%s1 + $0x14] sm:$0xf]
        %v308 = vld [vmem:[%s1 + $0x18] sm:$0xf]
        %v309 = vld [vmem:[%s1 + $0x1c] sm:$0xf]
        %v318 = vunpack.c.l.b16 %v302
        %v319 = vunpack.c.l.b16 %v303
        %v320 = vunpack.c.l.b16 %v304
        %v321 = vunpack.c.l.b16 %v305
        %v322 = vunpack.c.l.b16 %v306
        %v323 = vunpack.c.l.b16 %v307
        %v324 = vunpack.c.l.b16 %v308
        %v325 = vunpack.c.l.b16 %v309
        %v326 = vpack.c.b16 %v319, %v318
        %v327 = vpack.c.b16 %v321, %v320
        %v328 = vpack.c.b16 %v323, %v322
        %v329 = vpack.c.b16 %v325, %v324
        %v334 = vunpack.c.l.b16 %v298
        %v335 = vunpack.c.l.b16 %v299
        %v336 = vunpack.c.l.b16 %v300
        %v337 = vunpack.c.l.b16 %v301
        %v338 = vpack.c.b16 %v335, %v334
        %v339 = vpack.c.b16 %v337, %v336
        %vm342 = vcmask 261120
        %v344 = vsel %vm342, %v326, 0
        %v347 = vsel %vm342, %v327, 0
        %v350 = vsel %vm342, %v328, 0
        %v353 = vsel %vm342, %v329, 0
        %355 = vmatprep.subr.bf16.mxu0 0
        %356 = vmatpush1.bf16.msra.mxu0 %v338
        %357 = vmatprep.subr.bf16.mxu0 0
        %358 = vmatpush1.bf16.msra.mxu0 %v339
        %359 = vmatprep.subr.bf16.mxu0 0
        %360 = vmatpush1.bf16.msra.mxu0 0
        %361 = vmatprep.subr.bf16.mxu0 0
        %362 = vmatpush1.bf16.msra.mxu0 0
        %363 = vmatprep.subr.bf16.mxu0 0
        %364 = vmatpush1.bf16.msra.mxu0 0
        %365 = vmatprep.subr.bf16.mxu0 0
        %366 = vmatpush1.bf16.msra.mxu0 0
        %367 = vmatprep.subr.bf16.mxu0 0
        %368 = vmatpush1.bf16.msra.mxu0 0
        %369 = vmatprep.subr.bf16.mxu0 0
        %370 = vmatpush1.bf16.msra.mxu0 0
        %371 = vmatprep.subr.bf16.mxu0 0
        %372 = vmatpush1.bf16.msra.mxu0 0
        %373 = vmatprep.subr.bf16.mxu0 0
        %374 = vmatpush1.bf16.msra.mxu0 0
        %375 = vmatprep.subr.bf16.mxu0 0
        %376 = vmatpush1.bf16.msra.mxu0 0
        %377 = vmatprep.subr.bf16.mxu0 0
        %378 = vmatpush1.bf16.msra.mxu0 0
        %379 = vmatprep.subr.bf16.mxu0 0
        %380 = vmatpush1.bf16.msra.mxu0 0
        %381 = vmatprep.subr.bf16.mxu0 0
        %382 = vmatpush1.bf16.msra.mxu0 0
        %383 = vmatprep.subr.bf16.mxu0 0
        %384 = vmatpush1.bf16.msra.mxu0 0
        %385 = vmatprep.subr.bf16.mxu0 0
        %386 = vmatpush1.bf16.msra.mxu0 0
        %387 = vmatprep.mubr.bf16.mxu0 0
        %388 = vmatmul.mubr.bf16.gmra.mrb[0].mxu0 %v344
        %v389 = vpop.f32.mrb[0].mxu0
        %v390 = vadd.f32 0.0, %v389
        %v391 = vpop.f32.mrb[0].mxu0
        %v392 = vpop.f32.mrb[0].mxu0
        %v393 = vadd.f32 0.0, %v392
        %v394 = vpop.f32.mrb[0].mxu0
        %395 = vmatprep.mubr.bf16.mxu0 0
        %396 = vmatmul.mubr.bf16.gmra.mrb[0].mxu0 %v347
        %v397 = vpop.f32.mrb[0].mxu0
        %v398 = vadd.f32 0.0, %v397
        %v399 = vpop.f32.mrb[0].mxu0
        %v400 = vpop.f32.mrb[0].mxu0
        %v401 = vadd.f32 0.0, %v400
        %v402 = vpop.f32.mrb[0].mxu0
        %403 = vmatprep.mubr.bf16.mxu0 0
        %404 = vmatmul.mubr.bf16.gmra.mrb[0].mxu0 %v350
        %v405 = vpop.f32.mrb[0].mxu0
        %v406 = vadd.f32 0.0, %v405
        %v407 = vpop.f32.mrb[0].mxu0
        %v408 = vpop.f32.mrb[0].mxu0
        %v409 = vadd.f32 0.0, %v408
        %v410 = vpop.f32.mrb[0].mxu0
        %411 = vmatprep.mubr.bf16.mxu0 0
        %412 = vmatmul.mubr.bf16.gmra.mrb[0].mxu0 %v353
        %v413 = vpop.f32.mrb[0].mxu0
        %v414 = vadd.f32 0.0, %v413
        %v415 = vpop.f32.mrb[0].mxu0
        %v416 = vpop.f32.mrb[0].mxu0
        %v417 = vadd.f32 0.0, %v416
        %v418 = vpop.f32.mrb[0].mxu0
        %419 = vdwg.mxu0
        %v420 = vpack.c.bf16 %v393, %v390
        %v421 = vpack.c.bf16 %v401, %v398
        %v422 = vpack.c.bf16 %v409, %v406
        %v423 = vpack.c.bf16 %v417, %v414
        %v424 = vld [vmem:[%s256] sm:$0xf]
        %v425 = vld [vmem:[%s256 + $0x4] sm:$0xf]
        %v426 = vld [vmem:[%s256 + $0x8] sm:$0xf]
        %v427 = vld [vmem:[%s256 + $0xc] sm:$0xf]
        %v428 = vld [vmem:[%s256 + $0x10] sm:$0xf]
        %v429 = vld [vmem:[%s256 + $0x14] sm:$0xf]
        %v430 = vld [vmem:[%s256 + $0x18] sm:$0xf]
        %v431 = vld [vmem:[%s256 + $0x1c] sm:$0xf]
        %s432 = scalar_lea.vmem %s1, 32
        %v433 = vld [vmem:[%s432] sm:$0xf]
        %v434 = vld [vmem:[%s432 + $0x4] sm:$0xf]
        %v435 = vld [vmem:[%s432 + $0x8] sm:$0xf]
        %v436 = vld [vmem:[%s432 + $0xc] sm:$0xf]
        %v437 = vld [vmem:[%s432 + $0x10] sm:$0xf]
        %v438 = vld [vmem:[%s432 + $0x14] sm:$0xf]
        %v439 = vld [vmem:[%s432 + $0x18] sm:$0xf]
        %v440 = vld [vmem:[%s432 + $0x1c] sm:$0xf]
        %v449 = vunpack.c.l.b16 %v433
        %v450 = vunpack.c.l.b16 %v434
        %v451 = vunpack.c.l.b16 %v435
        %v452 = vunpack.c.l.b16 %v436
        %v453 = vunpack.c.l.b16 %v437
        %v454 = vunpack.c.l.b16 %v438
        %v455 = vunpack.c.l.b16 %v439
        %v456 = vunpack.c.l.b16 %v440
        %v457 = vpack.c.b16 %v450, %v449
        %v458 = vpack.c.b16 %v452, %v451
        %v459 = vpack.c.b16 %v454, %v453
        %v460 = vpack.c.b16 %v456, %v455
        %v462 = vsel %vm342, %v457, 0
        %v465 = vsel %vm342, %v458, 0
        %v468 = vsel %vm342, %v459, 0
        %v471 = vsel %vm342, %v460, 0
        %473 = vmatprep.subr.bf16.mxu0 0
        %474 = vmatpush1.bf16.msra.mxu0 %v338
        %475 = vmatprep.subr.bf16.mxu0 0
        %476 = vmatpush1.bf16.msra.mxu0 %v339
        %477 = vmatprep.subr.bf16.mxu0 0
        %478 = vmatpush1.bf16.msra.mxu0 0
        %479 = vmatprep.subr.bf16.mxu0 0
        %480 = vmatpush1.bf16.msra.mxu0 0
        %481 = vmatprep.subr.bf16.mxu0 0
        %482 = vmatpush1.bf16.msra.mxu0 0
        %483 = vmatprep.subr.bf16.mxu0 0
        %484 = vmatpush1.bf16.msra.mxu0 0
        %485 = vmatprep.subr.bf16.mxu0 0
        %486 = vmatpush1.bf16.msra.mxu0 0
        %487 = vmatprep.subr.bf16.mxu0 0
        %488 = vmatpush1.bf16.msra.mxu0 0
        %489 = vmatprep.subr.bf16.mxu0 0
        %490 = vmatpush1.bf16.msra.mxu0 0
        %491 = vmatprep.subr.bf16.mxu0 0
        %492 = vmatpush1.bf16.msra.mxu0 0
        %493 = vmatprep.subr.bf16.mxu0 0
        %494 = vmatpush1.bf16.msra.mxu0 0
        %495 = vmatprep.subr.bf16.mxu0 0
        %496 = vmatpush1.bf16.msra.mxu0 0
        %497 = vmatprep.subr.bf16.mxu0 0
        %498 = vmatpush1.bf16.msra.mxu0 0
        %499 = vmatprep.subr.bf16.mxu0 0
        %500 = vmatpush1.bf16.msra.mxu0 0
        %501 = vmatprep.subr.bf16.mxu0 0
        %502 = vmatpush1.bf16.msra.mxu0 0
        %503 = vmatprep.subr.bf16.mxu0 0
        %504 = vmatpush1.bf16.msra.mxu0 0
        %505 = vmatprep.mubr.bf16.mxu0 0
        %506 = vmatmul.mubr.bf16.gmra.mrb[0].mxu0 %v462
        %v507 = vpop.f32.mrb[0].mxu0
        %v508 = vadd.f32 0.0, %v507
        %v509 = vpop.f32.mrb[0].mxu0
        %v510 = vpop.f32.mrb[0].mxu0
        %v511 = vadd.f32 0.0, %v510
        %v512 = vpop.f32.mrb[0].mxu0
        %513 = vmatprep.mubr.bf16.mxu0 0
        %514 = vmatmul.mubr.bf16.gmra.mrb[0].mxu0 %v465
        %v515 = vpop.f32.mrb[0].mxu0
        %v516 = vadd.f32 0.0, %v515
        %v517 = vpop.f32.mrb[0].mxu0
        %v518 = vpop.f32.mrb[0].mxu0
        %v519 = vadd.f32 0.0, %v518
        %v520 = vpop.f32.mrb[0].mxu0
        %521 = vmatprep.mubr.bf16.mxu0 0
        %522 = vmatmul.mubr.bf16.gmra.mrb[0].mxu0 %v468
        %v523 = vpop.f32.mrb[0].mxu0
        %v524 = vadd.f32 0.0, %v523
        %v525 = vpop.f32.mrb[0].mxu0
        %v526 = vpop.f32.mrb[0].mxu0
        %v527 = vadd.f32 0.0, %v526
        %v528 = vpop.f32.mrb[0].mxu0
        %529 = vmatprep.mubr.bf16.mxu0 0
        %530 = vmatmul.mubr.bf16.gmra.mrb[0].mxu0 %v471
        %v531 = vpop.f32.mrb[0].mxu0
        %v532 = vadd.f32 0.0, %v531
        %v533 = vpop.f32.mrb[0].mxu0
        %v534 = vpop.f32.mrb[0].mxu0
        %v535 = vadd.f32 0.0, %v534
        %v536 = vpop.f32.mrb[0].mxu0
        %537 = vdwg.mxu0
        %v538 = vpack.c.bf16 %v511, %v508
        %v539 = vpack.c.bf16 %v519, %v516
        %v540 = vpack.c.bf16 %v527, %v524
        %v541 = vpack.c.bf16 %v535, %v532
        %s542 = scalar_lea.vmem %s256, 32 [#allocation2]
        %v543 = vld [vmem:[%s542] sm:$0xf]
        %v544 = vld [vmem:[%s542 + $0x4] sm:$0xf]
        %v545 = vld [vmem:[%s542 + $0x8] sm:$0xf]
        %v546 = vld [vmem:[%s542 + $0xc] sm:$0xf]
        %v547 = vld [vmem:[%s542 + $0x10] sm:$0xf]
        %v548 = vld [vmem:[%s542 + $0x14] sm:$0xf]
        %v549 = vld [vmem:[%s542 + $0x18] sm:$0xf]
        %v550 = vld [vmem:[%s542 + $0x1c] sm:$0xf]
        %v559 = vunpack.c.l.b16 %v543
        %v560 = vunpack.c.l.b16 %v544
        %v561 = vunpack.c.l.b16 %v545
        %v562 = vunpack.c.l.b16 %v546
        %v563 = vunpack.c.l.b16 %v547
        %v564 = vunpack.c.l.b16 %v548
        %v565 = vunpack.c.l.b16 %v549
        %v566 = vunpack.c.l.b16 %v550
        %v567 = vpack.c.b16 %v560, %v559
        %v568 = vpack.c.b16 %v562, %v561
        %v569 = vpack.c.b16 %v564, %v563
        %v570 = vpack.c.b16 %v566, %v565
        %vm575 = vcmask 523264
        %v577 = vsel %vm575, %v538, 0
        %v580 = vsel %vm575, %v539, 0
        %v583 = vsel %vm575, %v540, 0
        %v586 = vsel %vm575, %v541, 0
        %588 = vmatprep.subr.bf16.mxu0 0
        %589 = vmatpush1.bf16.msra.mxu0 %v567
        %590 = vmatprep.subr.bf16.mxu0 0
        %591 = vmatpush1.bf16.msra.mxu0 %v568
        %592 = vmatprep.subr.bf16.mxu0 0
        %593 = vmatpush1.bf16.msra.mxu0 %v569
        %594 = vmatprep.subr.bf16.mxu0 0
        %595 = vmatpush1.bf16.msra.mxu0 %v570
        %596 = vmatprep.subr.bf16.mxu0 0
        %597 = vmatpush1.bf16.msra.mxu0 0
        %598 = vmatprep.subr.bf16.mxu0 0
        %599 = vmatpush1.bf16.msra.mxu0 0
        %600 = vmatprep.subr.bf16.mxu0 0
        %601 = vmatpush1.bf16.msra.mxu0 0
        %602 = vmatprep.subr.bf16.mxu0 0
        %603 = vmatpush1.bf16.msra.mxu0 0
        %604 = vmatprep.subr.bf16.mxu0 0
        %605 = vmatpush1.bf16.msra.mxu0 0
        %606 = vmatprep.subr.bf16.mxu0 0
        %607 = vmatpush1.bf16.msra.mxu0 0
        %608 = vmatprep.subr.bf16.mxu0 0
        %609 = vmatpush1.bf16.msra.mxu0 0
        %610 = vmatprep.subr.bf16.mxu0 0
        %611 = vmatpush1.bf16.msra.mxu0 0
        %612 = vmatprep.subr.bf16.mxu0 0
        %613 = vmatpush1.bf16.msra.mxu0 0
        %614 = vmatprep.subr.bf16.mxu0 0
        %615 = vmatpush1.bf16.msra.mxu0 0
        %616 = vmatprep.subr.bf16.mxu0 0
        %617 = vmatpush1.bf16.msra.mxu0 0
        %618 = vmatprep.subr.bf16.mxu0 0
        %619 = vmatpush1.bf16.msra.mxu0 0
        %620 = vmatprep.mubr.bf16.mxu0 0
        %621 = vmatmul.mubr.bf16.gmra.mrb[0].mxu0 %v577
        %v622 = vpop.f32.mrb[0].mxu0
        %v623 = vadd.f32 0.0, %v622
        %v624 = vpop.f32.mrb[0].mxu0
        %v625 = vpop.f32.mrb[0].mxu0
        %v626 = vadd.f32 0.0, %v625
        %v627 = vpop.f32.mrb[0].mxu0
        %628 = vmatprep.mubr.bf16.mxu0 0
        %629 = vmatmul.mubr.bf16.gmra.mrb[0].mxu0 %v580
        %v630 = vpop.f32.mrb[0].mxu0
        %v631 = vadd.f32 0.0, %v630
        %v632 = vpop.f32.mrb[0].mxu0
        %v633 = vpop.f32.mrb[0].mxu0
        %v634 = vadd.f32 0.0, %v633
        %v635 = vpop.f32.mrb[0].mxu0
        %636 = vmatprep.mubr.bf16.mxu0 0
        %637 = vmatmul.mubr.bf16.gmra.mrb[0].mxu0 %v583
        %v638 = vpop.f32.mrb[0].mxu0
        %v639 = vadd.f32 0.0, %v638
        %v640 = vpop.f32.mrb[0].mxu0
        %v641 = vpop.f32.mrb[0].mxu0
        %v642 = vadd.f32 0.0, %v641
        %v643 = vpop.f32.mrb[0].mxu0
        %644 = vmatprep.mubr.bf16.mxu0 0
        %645 = vmatmul.mubr.bf16.gmra.mrb[0].mxu0 %v586
        %v646 = vpop.f32.mrb[0].mxu0
        %v647 = vadd.f32 0.0, %v646
        %v648 = vpop.f32.mrb[0].mxu0
        %v649 = vpop.f32.mrb[0].mxu0
        %v650 = vadd.f32 0.0, %v649
        %v651 = vpop.f32.mrb[0].mxu0
        %652 = vdwg.mxu0
        %v661 = vunpack.c.l.b16 %v424
        %v662 = vunpack.c.l.b16 %v425
        %v663 = vunpack.c.l.b16 %v426
        %v664 = vunpack.c.l.b16 %v427
        %v665 = vunpack.c.l.b16 %v428
        %v666 = vunpack.c.l.b16 %v429
        %v667 = vunpack.c.l.b16 %v430
        %v668 = vunpack.c.l.b16 %v431
        %v669 = vpack.c.b16 %v662, %v661
        %v670 = vpack.c.b16 %v664, %v663
        %v671 = vpack.c.b16 %v666, %v665
        %v672 = vpack.c.b16 %v668, %v667
        %v678 = vsel %vm575, %v420, 0
        %v681 = vsel %vm575, %v421, 0
        %v684 = vsel %vm575, %v422, 0
        %v687 = vsel %vm575, %v423, 0
        %689 = vmatprep.subr.bf16.mxu0 0
        %690 = vmatpush1.bf16.msra.mxu0 %v669
        %691 = vmatprep.subr.bf16.mxu0 0
        %692 = vmatpush1.bf16.msra.mxu0 %v670
        %693 = vmatprep.subr.bf16.mxu0 0
        %694 = vmatpush1.bf16.msra.mxu0 %v671
        %695 = vmatprep.subr.bf16.mxu0 0
        %696 = vmatpush1.bf16.msra.mxu0 %v672
        %697 = vmatprep.subr.bf16.mxu0 0
        %698 = vmatpush1.bf16.msra.mxu0 0
        %699 = vmatprep.subr.bf16.mxu0 0
        %700 = vmatpush1.bf16.msra.mxu0 0
        %701 = vmatprep.subr.bf16.mxu0 0
        %702 = vmatpush1.bf16.msra.mxu0 0
        %703 = vmatprep.subr.bf16.mxu0 0
        %704 = vmatpush1.bf16.msra.mxu0 0
        %705 = vmatprep.subr.bf16.mxu0 0
        %706 = vmatpush1.bf16.msra.mxu0 0
        %707 = vmatprep.subr.bf16.mxu0 0
        %708 = vmatpush1.bf16.msra.mxu0 0
        %709 = vmatprep.subr.bf16.mxu0 0
        %710 = vmatpush1.bf16.msra.mxu0 0
        %711 = vmatprep.subr.bf16.mxu0 0
        %712 = vmatpush1.bf16.msra.mxu0 0
        %713 = vmatprep.subr.bf16.mxu0 0
        %714 = vmatpush1.bf16.msra.mxu0 0
        %715 = vmatprep.subr.bf16.mxu0 0
        %716 = vmatpush1.bf16.msra.mxu0 0
        %717 = vmatprep.subr.bf16.mxu0 0
        %718 = vmatpush1.bf16.msra.mxu0 0
        %719 = vmatprep.subr.bf16.mxu0 0
        %720 = vmatpush1.bf16.msra.mxu0 0
        %721 = vmatprep.mubr.bf16.mxu0 0
        %722 = vmatmul.mubr.bf16.gmra.mrb[0].mxu0 %v678
        %v723 = vpop.f32.mrb[0].mxu0
        %v724 = vadd.f32 %v623, %v723
        %v725 = vpop.f32.mrb[0].mxu0
        %v726 = vpop.f32.mrb[0].mxu0
        %v727 = vadd.f32 %v626, %v726
        %v728 = vpop.f32.mrb[0].mxu0
        %729 = vmatprep.mubr.bf16.mxu0 0
        %730 = vmatmul.mubr.bf16.gmra.mrb[0].mxu0 %v681
        %v731 = vpop.f32.mrb[0].mxu0
        %v732 = vadd.f32 %v631, %v731
        %v733 = vpop.f32.mrb[0].mxu0
        %v734 = vpop.f32.mrb[0].mxu0
        %v735 = vadd.f32 %v634, %v734
        %v736 = vpop.f32.mrb[0].mxu0
        %737 = vmatprep.mubr.bf16.mxu0 0
        %738 = vmatmul.mubr.bf16.gmra.mrb[0].mxu0 %v684
        %v739 = vpop.f32.mrb[0].mxu0
        %v740 = vadd.f32 %v639, %v739
        %v741 = vpop.f32.mrb[0].mxu0
        %v742 = vpop.f32.mrb[0].mxu0
        %v743 = vadd.f32 %v642, %v742
        %v744 = vpop.f32.mrb[0].mxu0
        %745 = vmatprep.mubr.bf16.mxu0 0
        %746 = vmatmul.mubr.bf16.gmra.mrb[0].mxu0 %v687
        %v747 = vpop.f32.mrb[0].mxu0
        %v748 = vadd.f32 %v647, %v747
        %v749 = vpop.f32.mrb[0].mxu0
        %v750 = vpop.f32.mrb[0].mxu0
        %v751 = vadd.f32 %v650, %v750
        %v752 = vpop.f32.mrb[0].mxu0
        %753 = vdwg.mxu0
        %s754 = scalar_lea.vmem %s1, 64
        %v755 = vld [vmem:[%s754] sm:$0xf]
        %v756 = vld [vmem:[%s754 + $0x4] sm:$0xf]
        %v757 = vld [vmem:[%s754 + $0x8] sm:$0xf]
        %v758 = vld [vmem:[%s754 + $0xc] sm:$0xf]
        %v759 = vld [vmem:[%s754 + $0x10] sm:$0xf]
        %v760 = vld [vmem:[%s754 + $0x14] sm:$0xf]
        %v761 = vld [vmem:[%s754 + $0x18] sm:$0xf]
        %v762 = vld [vmem:[%s754 + $0x1c] sm:$0xf]
        %v771 = vunpack.c.l.b16 %v755
        %v772 = vunpack.c.l.b16 %v756
        %v773 = vunpack.c.l.b16 %v757
        %v774 = vunpack.c.l.b16 %v758
        %v775 = vunpack.c.l.b16 %v759
        %v776 = vunpack.c.l.b16 %v760
        %v777 = vunpack.c.l.b16 %v761
        %v778 = vunpack.c.l.b16 %v762
        %v779 = vpack.c.b16 %v772, %v771
        %v780 = vpack.c.b16 %v774, %v773
        %v781 = vpack.c.b16 %v776, %v775
        %v782 = vpack.c.b16 %v778, %v777
        %v784 = vsel %vm342, %v779, 0
        %v787 = vsel %vm342, %v780, 0
        %v790 = vsel %vm342, %v781, 0
        %v793 = vsel %vm342, %v782, 0
        %795 = vmatprep.subr.bf16.mxu0 0
        %796 = vmatpush1.bf16.msra.mxu0 %v338
        %797 = vmatprep.subr.bf16.mxu0 0
        %798 = vmatpush1.bf16.msra.mxu0 %v339
        %799 = vmatprep.subr.bf16.mxu0 0
        %800 = vmatpush1.bf16.msra.mxu0 0
        %801 = vmatprep.subr.bf16.mxu0 0
        %802 = vmatpush1.bf16.msra.mxu0 0
        %803 = vmatprep.subr.bf16.mxu0 0
        %804 = vmatpush1.bf16.msra.mxu0 0
        %805 = vmatprep.subr.bf16.mxu0 0
        %806 = vmatpush1.bf16.msra.mxu0 0
        %807 = vmatprep.subr.bf16.mxu0 0
        %808 = vmatpush1.bf16.msra.mxu0 0
        %809 = vmatprep.subr.bf16.mxu0 0
        %810 = vmatpush1.bf16.msra.mxu0 0
        %811 = vmatprep.subr.bf16.mxu0 0
        %812 = vmatpush1.bf16.msra.mxu0 0
        %813 = vmatprep.subr.bf16.mxu0 0
        %814 = vmatpush1.bf16.msra.mxu0 0
        %815 = vmatprep.subr.bf16.mxu0 0
        %816 = vmatpush1.bf16.msra.mxu0 0
        %817 = vmatprep.subr.bf16.mxu0 0
        %818 = vmatpush1.bf16.msra.mxu0 0
        %819 = vmatprep.subr.bf16.mxu0 0
        %820 = vmatpush1.bf16.msra.mxu0 0
        %821 = vmatprep.subr.bf16.mxu0 0
        %822 = vmatpush1.bf16.msra.mxu0 0
        %823 = vmatprep.subr.bf16.mxu0 0
        %824 = vmatpush1.bf16.msra.mxu0 0
        %825 = vmatprep.subr.bf16.mxu0 0
        %826 = vmatpush1.bf16.msra.mxu0 0
        %827 = vmatprep.mubr.bf16.mxu0 0
        %828 = vmatmul.mubr.bf16.gmra.mrb[0].mxu0 %v784
        %v829 = vpop.f32.mrb[0].mxu0
        %v830 = vadd.f32 0.0, %v829
        %v831 = vpop.f32.mrb[0].mxu0
        %v832 = vpop.f32.mrb[0].mxu0
        %v833 = vadd.f32 0.0, %v832
        %v834 = vpop.f32.mrb[0].mxu0
        %835 = vmatprep.mubr.bf16.mxu0 0
        %836 = vmatmul.mubr.bf16.gmra.mrb[0].mxu0 %v787
        %v837 = vpop.f32.mrb[0].mxu0
        %v838 = vadd.f32 0.0, %v837
        %v839 = vpop.f32.mrb[0].mxu0
        %v840 = vpop.f32.mrb[0].mxu0
        %v841 = vadd.f32 0.0, %v840
        %v842 = vpop.f32.mrb[0].mxu0
        %843 = vmatprep.mubr.bf16.mxu0 0
        %844 = vmatmul.mubr.bf16.gmra.mrb[0].mxu0 %v790
        %v845 = vpop.f32.mrb[0].mxu0
        %v846 = vadd.f32 0.0, %v845
        %v847 = vpop.f32.mrb[0].mxu0
        %v848 = vpop.f32.mrb[0].mxu0
        %v849 = vadd.f32 0.0, %v848
        %v850 = vpop.f32.mrb[0].mxu0
        %851 = vmatprep.mubr.bf16.mxu0 0
        %852 = vmatmul.mubr.bf16.gmra.mrb[0].mxu0 %v793
        %v853 = vpop.f32.mrb[0].mxu0
        %v854 = vadd.f32 0.0, %v853
        %v855 = vpop.f32.mrb[0].mxu0
        %v856 = vpop.f32.mrb[0].mxu0
        %v857 = vadd.f32 0.0, %v856
        %v858 = vpop.f32.mrb[0].mxu0
        %859 = vdwg.mxu0
        %v860 = vpack.c.bf16 %v833, %v830
        %v861 = vpack.c.bf16 %v841, %v838
        %v862 = vpack.c.bf16 %v849, %v846
        %v863 = vpack.c.bf16 %v857, %v854
        %s864 = scalar_lea.vmem %s256, 64 [#allocation2]
        %v865 = vld [vmem:[%s864] sm:$0xf]
        %v866 = vld [vmem:[%s864 + $0x4] sm:$0xf]
        %v867 = vld [vmem:[%s864 + $0x8] sm:$0xf]
        %v868 = vld [vmem:[%s864 + $0xc] sm:$0xf]
        %v869 = vld [vmem:[%s864 + $0x10] sm:$0xf]
        %v870 = vld [vmem:[%s864 + $0x14] sm:$0xf]
        %v871 = vld [vmem:[%s864 + $0x18] sm:$0xf]
        %v872 = vld [vmem:[%s864 + $0x1c] sm:$0xf]
        %v881 = vunpack.c.l.b16 %v865
        %v882 = vunpack.c.l.b16 %v866
        %v883 = vunpack.c.l.b16 %v867
        %v884 = vunpack.c.l.b16 %v868
        %v885 = vunpack.c.l.b16 %v869
        %v886 = vunpack.c.l.b16 %v870
        %v887 = vunpack.c.l.b16 %v871
        %v888 = vunpack.c.l.b16 %v872
        %v889 = vpack.c.b16 %v882, %v881
        %v890 = vpack.c.b16 %v884, %v883
        %v891 = vpack.c.b16 %v886, %v885
        %v892 = vpack.c.b16 %v888, %v887
        %v898 = vsel %vm575, %v860, 0
        %v901 = vsel %vm575, %v861, 0
        %v904 = vsel %vm575, %v862, 0
        %v907 = vsel %vm575, %v863, 0
        %909 = vmatprep.subr.bf16.mxu0 0
        %910 = vmatpush1.bf16.msra.mxu0 %v889
        %911 = vmatprep.subr.bf16.mxu0 0
        %912 = vmatpush1.bf16.msra.mxu0 %v890
        %913 = vmatprep.subr.bf16.mxu0 0
        %914 = vmatpush1.bf16.msra.mxu0 %v891
        %915 = vmatprep.subr.bf16.mxu0 0
        %916 = vmatpush1.bf16.msra.mxu0 %v892
        %917 = vmatprep.subr.bf16.mxu0 0
        %918 = vmatpush1.bf16.msra.mxu0 0
        %919 = vmatprep.subr.bf16.mxu0 0
        %920 = vmatpush1.bf16.msra.mxu0 0
        %921 = vmatprep.subr.bf16.mxu0 0
        %922 = vmatpush1.bf16.msra.mxu0 0
        %923 = vmatprep.subr.bf16.mxu0 0
        %924 = vmatpush1.bf16.msra.mxu0 0
        %925 = vmatprep.subr.bf16.mxu0 0
        %926 = vmatpush1.bf16.msra.mxu0 0
        %927 = vmatprep.subr.bf16.mxu0 0
        %928 = vmatpush1.bf16.msra.mxu0 0
        %929 = vmatprep.subr.bf16.mxu0 0
        %930 = vmatpush1.bf16.msra.mxu0 0
        %931 = vmatprep.subr.bf16.mxu0 0
        %932 = vmatpush1.bf16.msra.mxu0 0
        %933 = vmatprep.subr.bf16.mxu0 0
        %934 = vmatpush1.bf16.msra.mxu0 0
        %935 = vmatprep.subr.bf16.mxu0 0
        %936 = vmatpush1.bf16.msra.mxu0 0
        %937 = vmatprep.subr.bf16.mxu0 0
        %938 = vmatpush1.bf16.msra.mxu0 0
        %939 = vmatprep.subr.bf16.mxu0 0
        %940 = vmatpush1.bf16.msra.mxu0 0
        %941 = vmatprep.mubr.bf16.mxu0 0
        %942 = vmatmul.mubr.bf16.gmra.mrb[0].mxu0 %v898
        %v943 = vpop.f32.mrb[0].mxu0
        %v944 = vadd.f32 0.0, %v943
        %v945 = vpop.f32.mrb[0].mxu0
        %v946 = vpop.f32.mrb[0].mxu0
        %v947 = vadd.f32 0.0, %v946
        %v948 = vpop.f32.mrb[0].mxu0
        %949 = vmatprep.mubr.bf16.mxu0 0
        %950 = vmatmul.mubr.bf16.gmra.mrb[0].mxu0 %v901
        %v951 = vpop.f32.mrb[0].mxu0
        %v952 = vadd.f32 0.0, %v951
        %v953 = vpop.f32.mrb[0].mxu0
        %v954 = vpop.f32.mrb[0].mxu0
        %v955 = vadd.f32 0.0, %v954
        %v956 = vpop.f32.mrb[0].mxu0
        %957 = vmatprep.mubr.bf16.mxu0 0
        %958 = vmatmul.mubr.bf16.gmra.mrb[0].mxu0 %v904
        %v959 = vpop.f32.mrb[0].mxu0
        %v960 = vadd.f32 0.0, %v959
        %v961 = vpop.f32.mrb[0].mxu0
        %v962 = vpop.f32.mrb[0].mxu0
        %v963 = vadd.f32 0.0, %v962
        %v964 = vpop.f32.mrb[0].mxu0
        %965 = vmatprep.mubr.bf16.mxu0 0
        %966 = vmatmul.mubr.bf16.gmra.mrb[0].mxu0 %v907
        %v967 = vpop.f32.mrb[0].mxu0
        %v968 = vadd.f32 0.0, %v967
        %v969 = vpop.f32.mrb[0].mxu0
        %v970 = vpop.f32.mrb[0].mxu0
        %v971 = vadd.f32 0.0, %v970
        %v972 = vpop.f32.mrb[0].mxu0
        %973 = vdwg.mxu0
        %v974 = vadd.f32 %v724, %v944
        %v975 = vadd.f32 %v727, %v947
        %v976 = vadd.f32 %v732, %v952
        %v977 = vadd.f32 %v735, %v955
        %v978 = vadd.f32 %v740, %v960
        %v979 = vadd.f32 %v743, %v963
        %v980 = vadd.f32 %v748, %v968
        %v981 = vadd.f32 %v751, %v971
        %s982 = scalar_lea.vmem %s1, 96
        %v983 = vld [vmem:[%s982] sm:$0xf]
        %v984 = vld [vmem:[%s982 + $0x4] sm:$0xf]
        %v985 = vld [vmem:[%s982 + $0x8] sm:$0xf]
        %v986 = vld [vmem:[%s982 + $0xc] sm:$0xf]
        %v987 = vld [vmem:[%s982 + $0x10] sm:$0xf]
        %v988 = vld [vmem:[%s982 + $0x14] sm:$0xf]
        %v989 = vld [vmem:[%s982 + $0x18] sm:$0xf]
        %v990 = vld [vmem:[%s982 + $0x1c] sm:$0xf]
        %v999 = vunpack.c.l.b16 %v983
        %v1000 = vunpack.c.l.b16 %v984
        %v1001 = vunpack.c.l.b16 %v985
        %v1002 = vunpack.c.l.b16 %v986
        %v1003 = vunpack.c.l.b16 %v987
        %v1004 = vunpack.c.l.b16 %v988
        %v1005 = vunpack.c.l.b16 %v989
        %v1006 = vunpack.c.l.b16 %v990
        %v1007 = vpack.c.b16 %v1000, %v999
        %v1008 = vpack.c.b16 %v1002, %v1001
        %v1009 = vpack.c.b16 %v1004, %v1003
        %v1010 = vpack.c.b16 %v1006, %v1005
        %v1012 = vsel %vm342, %v1007, 0
        %v1015 = vsel %vm342, %v1008, 0
        %v1018 = vsel %vm342, %v1009, 0
        %v1021 = vsel %vm342, %v1010, 0
        %1023 = vmatprep.subr.bf16.mxu0 0
        %1024 = vmatpush1.bf16.msra.mxu0 %v338
        %1025 = vmatprep.subr.bf16.mxu0 0
        %1026 = vmatpush1.bf16.msra.mxu0 %v339
        %1027 = vmatprep.subr.bf16.mxu0 0
        %1028 = vmatpush1.bf16.msra.mxu0 0
        %1029 = vmatprep.subr.bf16.mxu0 0
        %1030 = vmatpush1.bf16.msra.mxu0 0
        %1031 = vmatprep.subr.bf16.mxu0 0
        %1032 = vmatpush1.bf16.msra.mxu0 0
        %1033 = vmatprep.subr.bf16.mxu0 0
        %1034 = vmatpush1.bf16.msra.mxu0 0
        %1035 = vmatprep.subr.bf16.mxu0 0
        %1036 = vmatpush1.bf16.msra.mxu0 0
        %1037 = vmatprep.subr.bf16.mxu0 0
        %1038 = vmatpush1.bf16.msra.mxu0 0
        %1039 = vmatprep.subr.bf16.mxu0 0
        %1040 = vmatpush1.bf16.msra.mxu0 0
        %1041 = vmatprep.subr.bf16.mxu0 0
        %1042 = vmatpush1.bf16.msra.mxu0 0
        %1043 = vmatprep.subr.bf16.mxu0 0
        %1044 = vmatpush1.bf16.msra.mxu0 0
        %1045 = vmatprep.subr.bf16.mxu0 0
        %1046 = vmatpush1.bf16.msra.mxu0 0
        %1047 = vmatprep.subr.bf16.mxu0 0
        %1048 = vmatpush1.bf16.msra.mxu0 0
        %1049 = vmatprep.subr.bf16.mxu0 0
        %1050 = vmatpush1.bf16.msra.mxu0 0
        %1051 = vmatprep.subr.bf16.mxu0 0
        %1052 = vmatpush1.bf16.msra.mxu0 0
        %1053 = vmatprep.subr.bf16.mxu0 0
        %1054 = vmatpush1.bf16.msra.mxu0 0
        %1055 = vmatprep.mubr.bf16.mxu0 0
        %1056 = vmatmul.mubr.bf16.gmra.mrb[0].mxu0 %v1012
        %v1057 = vpop.f32.mrb[0].mxu0
        %v1058 = vadd.f32 0.0, %v1057
        %v1059 = vpop.f32.mrb[0].mxu0
        %v1060 = vpop.f32.mrb[0].mxu0
        %v1061 = vadd.f32 0.0, %v1060
        %v1062 = vpop.f32.mrb[0].mxu0
        %1063 = vmatprep.mubr.bf16.mxu0 0
        %1064 = vmatmul.mubr.bf16.gmra.mrb[0].mxu0 %v1015
        %v1065 = vpop.f32.mrb[0].mxu0
        %v1066 = vadd.f32 0.0, %v1065
        %v1067 = vpop.f32.mrb[0].mxu0
        %v1068 = vpop.f32.mrb[0].mxu0
        %v1069 = vadd.f32 0.0, %v1068
        %v1070 = vpop.f32.mrb[0].mxu0
        %1071 = vmatprep.mubr.bf16.mxu0 0
        %1072 = vmatmul.mubr.bf16.gmra.mrb[0].mxu0 %v1018
        %v1073 = vpop.f32.mrb[0].mxu0
        %v1074 = vadd.f32 0.0, %v1073
        %v1075 = vpop.f32.mrb[0].mxu0
        %v1076 = vpop.f32.mrb[0].mxu0
        %v1077 = vadd.f32 0.0, %v1076
        %v1078 = vpop.f32.mrb[0].mxu0
        %1079 = vmatprep.mubr.bf16.mxu0 0
        %1080 = vmatmul.mubr.bf16.gmra.mrb[0].mxu0 %v1021
        %v1081 = vpop.f32.mrb[0].mxu0
        %v1082 = vadd.f32 0.0, %v1081
        %v1083 = vpop.f32.mrb[0].mxu0
        %v1084 = vpop.f32.mrb[0].mxu0
        %v1085 = vadd.f32 0.0, %v1084
        %v1086 = vpop.f32.mrb[0].mxu0
        %1087 = vdwg.mxu0
        %v1088 = vpack.c.bf16 %v1061, %v1058
        %v1089 = vpack.c.bf16 %v1069, %v1066
        %v1090 = vpack.c.bf16 %v1077, %v1074
        %v1091 = vpack.c.bf16 %v1085, %v1082
        %s1092 = scalar_lea.vmem %s256, 96 [#allocation2]
        %v1093 = vld [vmem:[%s1092] sm:$0xf]
        %v1094 = vld [vmem:[%s1092 + $0x4] sm:$0xf]
        %v1095 = vld [vmem:[%s1092 + $0x8] sm:$0xf]
        %v1096 = vld [vmem:[%s1092 + $0xc] sm:$0xf]
        %v1097 = vld [vmem:[%s1092 + $0x10] sm:$0xf]
        %v1098 = vld [vmem:[%s1092 + $0x14] sm:$0xf]
        %v1099 = vld [vmem:[%s1092 + $0x18] sm:$0xf]
        %v1100 = vld [vmem:[%s1092 + $0x1c] sm:$0xf]
        %v1109 = vunpack.c.l.b16 %v1093
        %v1110 = vunpack.c.l.b16 %v1094
        %v1111 = vunpack.c.l.b16 %v1095
        %v1112 = vunpack.c.l.b16 %v1096
        %v1113 = vunpack.c.l.b16 %v1097
        %v1114 = vunpack.c.l.b16 %v1098
        %v1115 = vunpack.c.l.b16 %v1099
        %v1116 = vunpack.c.l.b16 %v1100
        %v1117 = vpack.c.b16 %v1110, %v1109
        %v1118 = vpack.c.b16 %v1112, %v1111
        %v1119 = vpack.c.b16 %v1114, %v1113
        %v1120 = vpack.c.b16 %v1116, %v1115
        %v1126 = vsel %vm575, %v1088, 0
        %v1129 = vsel %vm575, %v1089, 0
        %v1132 = vsel %vm575, %v1090, 0
        %v1135 = vsel %vm575, %v1091, 0
        %1137 = vmatprep.subr.bf16.mxu0 0
        %1138 = vmatpush1.bf16.msra.mxu0 %v1117
        %1139 = vmatprep.subr.bf16.mxu0 0
        %1140 = vmatpush1.bf16.msra.mxu0 %v1118
        %1141 = vmatprep.subr.bf16.mxu0 0
        %1142 = vmatpush1.bf16.msra.mxu0 %v1119
        %1143 = vmatprep.subr.bf16.mxu0 0
        %1144 = vmatpush1.bf16.msra.mxu0 %v1120
        %1145 = vmatprep.subr.bf16.mxu0 0
        %1146 = vmatpush1.bf16.msra.mxu0 0
        %1147 = vmatprep.subr.bf16.mxu0 0
        %1148 = vmatpush1.bf16.msra.mxu0 0
        %1149 = vmatprep.subr.bf16.mxu0 0
        %1150 = vmatpush1.bf16.msra.mxu0 0
        %1151 = vmatprep.subr.bf16.mxu0 0
        %1152 = vmatpush1.bf16.msra.mxu0 0
        %1153 = vmatprep.subr.bf16.mxu0 0
        %1154 = vmatpush1.bf16.msra.mxu0 0
        %1155 = vmatprep.subr.bf16.mxu0 0
        %1156 = vmatpush1.bf16.msra.mxu0 0
        %1157 = vmatprep.subr.bf16.mxu0 0
        %1158 = vmatpush1.bf16.msra.mxu0 0
        %1159 = vmatprep.subr.bf16.mxu0 0
        %1160 = vmatpush1.bf16.msra.mxu0 0
        %1161 = vmatprep.subr.bf16.mxu0 0
        %1162 = vmatpush1.bf16.msra.mxu0 0
        %1163 = vmatprep.subr.bf16.mxu0 0
        %1164 = vmatpush1.bf16.msra.mxu0 0
        %1165 = vmatprep.subr.bf16.mxu0 0
        %1166 = vmatpush1.bf16.msra.mxu0 0
        %1167 = vmatprep.subr.bf16.mxu0 0
        %1168 = vmatpush1.bf16.msra.mxu0 0
        %1169 = vmatprep.mubr.bf16.mxu0 0
        %1170 = vmatmul.mubr.bf16.gmra.mrb[0].mxu0 %v1126
        %v1171 = vpop.f32.mrb[0].mxu0
        %v1172 = vadd.f32 0.0, %v1171
        %v1173 = vpop.f32.mrb[0].mxu0
        %v1174 = vpop.f32.mrb[0].mxu0
        %v1175 = vadd.f32 0.0, %v1174
        %v1176 = vpop.f32.mrb[0].mxu0
        %1177 = vmatprep.mubr.bf16.mxu0 0
        %1178 = vmatmul.mubr.bf16.gmra.mrb[0].mxu0 %v1129
        %v1179 = vpop.f32.mrb[0].mxu0
        %v1180 = vadd.f32 0.0, %v1179
        %v1181 = vpop.f32.mrb[0].mxu0
        %v1182 = vpop.f32.mrb[0].mxu0
        %v1183 = vadd.f32 0.0, %v1182
        %v1184 = vpop.f32.mrb[0].mxu0
        %1185 = vmatprep.mubr.bf16.mxu0 0
        %1186 = vmatmul.mubr.bf16.gmra.mrb[0].mxu0 %v1132
        %v1187 = vpop.f32.mrb[0].mxu0
        %v1188 = vadd.f32 0.0, %v1187
        %v1189 = vpop.f32.mrb[0].mxu0
        %v1190 = vpop.f32.mrb[0].mxu0
        %v1191 = vadd.f32 0.0, %v1190
        %v1192 = vpop.f32.mrb[0].mxu0
        %1193 = vmatprep.mubr.bf16.mxu0 0
        %1194 = vmatmul.mubr.bf16.gmra.mrb[0].mxu0 %v1135
        %v1195 = vpop.f32.mrb[0].mxu0
        %v1196 = vadd.f32 0.0, %v1195
        %v1197 = vpop.f32.mrb[0].mxu0
        %v1198 = vpop.f32.mrb[0].mxu0
        %v1199 = vadd.f32 0.0, %v1198
        %v1200 = vpop.f32.mrb[0].mxu0
        %1201 = vdwg.mxu0
        %v1202 = vadd.f32 %v974, %v1172
        %v1203 = vadd.f32 %v975, %v1175
        %v1204 = vadd.f32 %v976, %v1180
        %v1205 = vadd.f32 %v977, %v1183
        %v1206 = vadd.f32 %v978, %v1188
        %v1207 = vadd.f32 %v979, %v1191
        %v1208 = vadd.f32 %v980, %v1196
        %v1209 = vadd.f32 %v981, %v1199
        %s1210 = scalar_lea.vmem %s1, 128
        %v1211 = vld [vmem:[%s1210] sm:$0xf]
        %v1212 = vld [vmem:[%s1210 + $0x4] sm:$0xf]
        %v1213 = vld [vmem:[%s1210 + $0x8] sm:$0xf]
        %v1214 = vld [vmem:[%s1210 + $0xc] sm:$0xf]
        %v1215 = vld [vmem:[%s1210 + $0x10] sm:$0xf]
        %v1216 = vld [vmem:[%s1210 + $0x14] sm:$0xf]
        %v1217 = vld [vmem:[%s1210 + $0x18] sm:$0xf]
        %v1218 = vld [vmem:[%s1210 + $0x1c] sm:$0xf]
        %v1227 = vunpack.c.l.b16 %v1211
        %v1228 = vunpack.c.l.b16 %v1212
        %v1229 = vunpack.c.l.b16 %v1213
        %v1230 = vunpack.c.l.b16 %v1214
        %v1231 = vunpack.c.l.b16 %v1215
        %v1232 = vunpack.c.l.b16 %v1216
        %v1233 = vunpack.c.l.b16 %v1217
        %v1234 = vunpack.c.l.b16 %v1218
        %v1235 = vpack.c.b16 %v1228, %v1227
        %v1236 = vpack.c.b16 %v1230, %v1229
        %v1237 = vpack.c.b16 %v1232, %v1231
        %v1238 = vpack.c.b16 %v1234, %v1233
        %v1240 = vsel %vm342, %v1235, 0
        %v1243 = vsel %vm342, %v1236, 0
        %v1246 = vsel %vm342, %v1237, 0
        %v1249 = vsel %vm342, %v1238, 0
        %1251 = vmatprep.subr.bf16.mxu0 0
        %1252 = vmatpush1.bf16.msra.mxu0 %v338
        %1253 = vmatprep.subr.bf16.mxu0 0
        %1254 = vmatpush1.bf16.msra.mxu0 %v339
        %1255 = vmatprep.subr.bf16.mxu0 0
        %1256 = vmatpush1.bf16.msra.mxu0 0
        %1257 = vmatprep.subr.bf16.mxu0 0
        %1258 = vmatpush1.bf16.msra.mxu0 0
        %1259 = vmatprep.subr.bf16.mxu0 0
        %1260 = vmatpush1.bf16.msra.mxu0 0
        %1261 = vmatprep.subr.bf16.mxu0 0
        %1262 = vmatpush1.bf16.msra.mxu0 0
        %1263 = vmatprep.subr.bf16.mxu0 0
        %1264 = vmatpush1.bf16.msra.mxu0 0
        %1265 = vmatprep.subr.bf16.mxu0 0
        %1266 = vmatpush1.bf16.msra.mxu0 0
        %1267 = vmatprep.subr.bf16.mxu0 0
        %1268 = vmatpush1.bf16.msra.mxu0 0
        %1269 = vmatprep.subr.bf16.mxu0 0
        %1270 = vmatpush1.bf16.msra.mxu0 0
        %1271 = vmatprep.subr.bf16.mxu0 0
        %1272 = vmatpush1.bf16.msra.mxu0 0
        %1273 = vmatprep.subr.bf16.mxu0 0
        %1274 = vmatpush1.bf16.msra.mxu0 0
        %1275 = vmatprep.subr.bf16.mxu0 0
        %1276 = vmatpush1.bf16.msra.mxu0 0
        %1277 = vmatprep.subr.bf16.mxu0 0
        %1278 = vmatpush1.bf16.msra.mxu0 0
        %1279 = vmatprep.subr.bf16.mxu0 0
        %1280 = vmatpush1.bf16.msra.mxu0 0
        %1281 = vmatprep.subr.bf16.mxu0 0
        %1282 = vmatpush1.bf16.msra.mxu0 0
        %1283 = vmatprep.mubr.bf16.mxu0 0
        %1284 = vmatmul.mubr.bf16.gmra.mrb[0].mxu0 %v1240
        %v1285 = vpop.f32.mrb[0].mxu0
        %v1286 = vadd.f32 0.0, %v1285
        %v1287 = vpop.f32.mrb[0].mxu0
        %v1288 = vpop.f32.mrb[0].mxu0
        %v1289 = vadd.f32 0.0, %v1288
        %v1290 = vpop.f32.mrb[0].mxu0
        %1291 = vmatprep.mubr.bf16.mxu0 0
        %1292 = vmatmul.mubr.bf16.gmra.mrb[0].mxu0 %v1243
        %v1293 = vpop.f32.mrb[0].mxu0
        %v1294 = vadd.f32 0.0, %v1293
        %v1295 = vpop.f32.mrb[0].mxu0
        %v1296 = vpop.f32.mrb[0].mxu0
        %v1297 = vadd.f32 0.0, %v1296
        %v1298 = vpop.f32.mrb[0].mxu0
        %1299 = vmatprep.mubr.bf16.mxu0 0
        %1300 = vmatmul.mubr.bf16.gmra.mrb[0].mxu0 %v1246
        %v1301 = vpop.f32.mrb[0].mxu0
        %v1302 = vadd.f32 0.0, %v1301
        %v1303 = vpop.f32.mrb[0].mxu0
        %v1304 = vpop.f32.mrb[0].mxu0
        %v1305 = vadd.f32 0.0, %v1304
        %v1306 = vpop.f32.mrb[0].mxu0
        %1307 = vmatprep.mubr.bf16.mxu0 0
        %1308 = vmatmul.mubr.bf16.gmra.mrb[0].mxu0 %v1249
        %v1309 = vpop.f32.mrb[0].mxu0
        %v1310 = vadd.f32 0.0, %v1309
        %v1311 = vpop.f32.mrb[0].mxu0
        %v1312 = vpop.f32.mrb[0].mxu0
        %v1313 = vadd.f32 0.0, %v1312
        %v1314 = vpop.f32.mrb[0].mxu0
        %1315 = vdwg.mxu0
        %v1316 = vpack.c.bf16 %v1289, %v1286
        %v1317 = vpack.c.bf16 %v1297, %v1294
        %v1318 = vpack.c.bf16 %v1305, %v1302
        %v1319 = vpack.c.bf16 %v1313, %v1310
        %s1320 = scalar_lea.vmem %s256, 128 [#allocation2]
        %v1321 = vld [vmem:[%s1320] sm:$0xf]
        %v1322 = vld [vmem:[%s1320 + $0x4] sm:$0xf]
        %v1323 = vld [vmem:[%s1320 + $0x8] sm:$0xf]
        %v1324 = vld [vmem:[%s1320 + $0xc] sm:$0xf]
        %v1325 = vld [vmem:[%s1320 + $0x10] sm:$0xf]
        %v1326 = vld [vmem:[%s1320 + $0x14] sm:$0xf]
        %v1327 = vld [vmem:[%s1320 + $0x18] sm:$0xf]
        %v1328 = vld [vmem:[%s1320 + $0x1c] sm:$0xf]
        %v1337 = vunpack.c.l.b16 %v1321
        %v1338 = vunpack.c.l.b16 %v1322
        %v1339 = vunpack.c.l.b16 %v1323
        %v1340 = vunpack.c.l.b16 %v1324
        %v1341 = vunpack.c.l.b16 %v1325
        %v1342 = vunpack.c.l.b16 %v1326
        %v1343 = vunpack.c.l.b16 %v1327
        %v1344 = vunpack.c.l.b16 %v1328
        %v1345 = vpack.c.b16 %v1338, %v1337
        %v1346 = vpack.c.b16 %v1340, %v1339
        %v1347 = vpack.c.b16 %v1342, %v1341
        %v1348 = vpack.c.b16 %v1344, %v1343
        %v1354 = vsel %vm575, %v1316, 0
        %v1357 = vsel %vm575, %v1317, 0
        %v1360 = vsel %vm575, %v1318, 0
        %v1363 = vsel %vm575, %v1319, 0
        %1365 = vmatprep.subr.bf16.mxu0 0
        %1366 = vmatpush1.bf16.msra.mxu0 %v1345
        %1367 = vmatprep.subr.bf16.mxu0 0
        %1368 = vmatpush1.bf16.msra.mxu0 %v1346
        %1369 = vmatprep.subr.bf16.mxu0 0
        %1370 = vmatpush1.bf16.msra.mxu0 %v1347
        %1371 = vmatprep.subr.bf16.mxu0 0
        %1372 = vmatpush1.bf16.msra.mxu0 %v1348
        %1373 = vmatprep.subr.bf16.mxu0 0
        %1374 = vmatpush1.bf16.msra.mxu0 0
        %1375 = vmatprep.subr.bf16.mxu0 0
        %1376 = vmatpush1.bf16.msra.mxu0 0
        %1377 = vmatprep.subr.bf16.mxu0 0
        %1378 = vmatpush1.bf16.msra.mxu0 0
        %1379 = vmatprep.subr.bf16.mxu0 0
        %1380 = vmatpush1.bf16.msra.mxu0 0
        %1381 = vmatprep.subr.bf16.mxu0 0
        %1382 = vmatpush1.bf16.msra.mxu0 0
        %1383 = vmatprep.subr.bf16.mxu0 0
        %1384 = vmatpush1.bf16.msra.mxu0 0
        %1385 = vmatprep.subr.bf16.mxu0 0
        %1386 = vmatpush1.bf16.msra.mxu0 0
        %1387 = vmatprep.subr.bf16.mxu0 0
        %1388 = vmatpush1.bf16.msra.mxu0 0
        %1389 = vmatprep.subr.bf16.mxu0 0
        %1390 = vmatpush1.bf16.msra.mxu0 0
        %1391 = vmatprep.subr.bf16.mxu0 0
        %1392 = vmatpush1.bf16.msra.mxu0 0
        %1393 = vmatprep.subr.bf16.mxu0 0
        %1394 = vmatpush1.bf16.msra.mxu0 0
        %1395 = vmatprep.subr.bf16.mxu0 0
        %1396 = vmatpush1.bf16.msra.mxu0 0
        %1397 = vmatprep.mubr.bf16.mxu0 0
        %1398 = vmatmul.mubr.bf16.gmra.mrb[0].mxu0 %v1354
        %v1399 = vpop.f32.mrb[0].mxu0
        %v1400 = vadd.f32 0.0, %v1399
        %v1401 = vpop.f32.mrb[0].mxu0
        %v1402 = vpop.f32.mrb[0].mxu0
        %v1403 = vadd.f32 0.0, %v1402
        %v1404 = vpop.f32.mrb[0].mxu0
        %1405 = vmatprep.mubr.bf16.mxu0 0
        %1406 = vmatmul.mubr.bf16.gmra.mrb[0].mxu0 %v1357
        %v1407 = vpop.f32.mrb[0].mxu0
        %v1408 = vadd.f32 0.0, %v1407
        %v1409 = vpop.f32.mrb[0].mxu0
        %v1410 = vpop.f32.mrb[0].mxu0
        %v1411 = vadd.f32 0.0, %v1410
        %v1412 = vpop.f32.mrb[0].mxu0
        %1413 = vmatprep.mubr.bf16.mxu0 0
        %1414 = vmatmul.mubr.bf16.gmra.mrb[0].mxu0 %v1360
        %v1415 = vpop.f32.mrb[0].mxu0
        %v1416 = vadd.f32 0.0, %v1415
        %v1417 = vpop.f32.mrb[0].mxu0
        %v1418 = vpop.f32.mrb[0].mxu0
        %v1419 = vadd.f32 0.0, %v1418
        %v1420 = vpop.f32.mrb[0].mxu0
        %1421 = vmatprep.mubr.bf16.mxu0 0
        %1422 = vmatmul.mubr.bf16.gmra.mrb[0].mxu0 %v1363
        %v1423 = vpop.f32.mrb[0].mxu0
        %v1424 = vadd.f32 0.0, %v1423
        %v1425 = vpop.f32.mrb[0].mxu0
        %v1426 = vpop.f32.mrb[0].mxu0
        %v1427 = vadd.f32 0.0, %v1426
        %v1428 = vpop.f32.mrb[0].mxu0
        %1429 = vdwg.mxu0
        %v1430 = vadd.f32 %v1202, %v1400
        %v1431 = vadd.f32 %v1203, %v1403
        %v1432 = vadd.f32 %v1204, %v1408
        %v1433 = vadd.f32 %v1205, %v1411
        %v1434 = vadd.f32 %v1206, %v1416
        %v1435 = vadd.f32 %v1207, %v1419
        %v1436 = vadd.f32 %v1208, %v1424
        %v1437 = vadd.f32 %v1209, %v1427
        %v1438 = vadd.f32 %v1430, %v1431
        %v1439 = vadd.f32 %v1438, %v1432
        %v1440 = vadd.f32 %v1439, %v1433
        %v1441 = vadd.f32 %v1440, %v1434
        %v1442 = vadd.f32 %v1441, %v1435
        %v1443 = vadd.f32 %v1442, %v1436
        %v1444 = vadd.f32 %v1443, %v1437
        %v1445 = vrot.slane %v1444, 4
        %v1446 = vadd.f32 %v1444, %v1445
        %v1447 = vrot.slane %v1446, 2
        %v1448 = vadd.f32 %v1446, %v1447
        %v1449 = vrot.slane %v1448, 1
        %v1450 = vadd.f32 %v1448, %v1449
        %v1451 = vmul.f32 %v1430, %v1430
        %v1452 = vmul.f32 %v1431, %v1431
        %v1453 = vmul.f32 %v1432, %v1432
        %v1454 = vmul.f32 %v1433, %v1433
        %v1455 = vmul.f32 %v1434, %v1434
        %v1456 = vmul.f32 %v1435, %v1435
        %v1457 = vmul.f32 %v1436, %v1436
        %v1458 = vmul.f32 %v1437, %v1437
        %v1459 = vadd.f32 %v1451, %v1452
        %v1460 = vadd.f32 %v1459, %v1453
        %v1461 = vadd.f32 %v1460, %v1454
        %v1462 = vadd.f32 %v1461, %v1455
        %v1463 = vadd.f32 %v1462, %v1456
        %v1464 = vadd.f32 %v1463, %v1457
        %v1465 = vadd.f32 %v1464, %v1458
        %v1466 = vrot.slane %v1465, 4
        %v1467 = vadd.f32 %v1465, %v1466
        %v1468 = vrot.slane %v1467, 2
        %v1469 = vadd.f32 %v1467, %v1468
        %v1470 = vrot.slane %v1469, 1
        %v1471 = vadd.f32 %v1469, %v1470
        %v1472 = vld [vmem:[%s5] sm:$0xff]
        %v1473 = vld [vmem:[%s5 + $0x8] sm:$0xff]
        %v1474 = vld [vmem:[%s5 + $0x10] sm:$0xff]
        %v1475 = vld [vmem:[%s5 + $0x18] sm:$0xff]
        %v1476 = vld [vmem:[%s5 + $0x20] sm:$0xff]
        %v1477 = vld [vmem:[%s5 + $0x28] sm:$0xff]
        %v1478 = vld [vmem:[%s5 + $0x30] sm:$0xff]
        %v1479 = vld [vmem:[%s5 + $0x38] sm:$0xff]
        %v1480 = vld [vmem:[%s5 + $0x40] sm:$0xff]
        %v1481 = vld [vmem:[%s5 + $0x48] sm:$0xff]
        %v1482 = vld [vmem:[%s5 + $0x50] sm:$0xff]
        %v1483 = vld [vmem:[%s5 + $0x58] sm:$0xff]
        %v1484 = vld [vmem:[%s5 + $0x60] sm:$0xff]
        %v1485 = vld [vmem:[%s5 + $0x68] sm:$0xff]
        %v1486 = vld [vmem:[%s5 + $0x70] sm:$0xff]
        %v1487 = vld [vmem:[%s5 + $0x78] sm:$0xff]
        %1488 = vmatprep.subr.mxu0 0.0
        %1489 = vmatpush1.msra.mxu0 %v1472
        %1490 = vmatprep.subr.mxu0 0.0
        %1491 = vmatpush1.msra.mxu0 %v1473
        %1492 = vmatprep.subr.mxu0 0.0
        %1493 = vmatpush1.msra.mxu0 %v1474
        %1494 = vmatprep.subr.mxu0 0.0
        %1495 = vmatpush1.msra.mxu0 %v1475
        %1496 = vmatprep.subr.mxu0 0.0
        %1497 = vmatpush1.msra.mxu0 %v1476
        %1498 = vmatprep.subr.mxu0 0.0
        %1499 = vmatpush1.msra.mxu0 %v1477
        %1500 = vmatprep.subr.mxu0 0.0
        %1501 = vmatpush1.msra.mxu0 %v1478
        %1502 = vmatprep.subr.mxu0 0.0
        %1503 = vmatpush1.msra.mxu0 %v1479
        %1504 = vmatprep.subr.mxu0 0.0
        %1505 = vmatpush1.msra.mxu0 %v1480
        %1506 = vmatprep.subr.mxu0 0.0
        %1507 = vmatpush1.msra.mxu0 %v1481
        %1508 = vmatprep.subr.mxu0 0.0
        %1509 = vmatpush1.msra.mxu0 %v1482
        %1510 = vmatprep.subr.mxu0 0.0
        %1511 = vmatpush1.msra.mxu0 %v1483
        %1512 = vmatprep.subr.mxu0 0.0
        %1513 = vmatpush1.msra.mxu0 %v1484
        %1514 = vmatprep.subr.mxu0 0.0
        %1515 = vmatpush1.msra.mxu0 %v1485
        %1516 = vmatprep.subr.mxu0 0.0
        %1517 = vmatpush1.msra.mxu0 %v1486
        %1518 = vmatprep.subr.mxu0 0.0
        %1519 = vmatpush1.msra.mxu0 %v1487
        %1520 = vmatprep.subr.mxu0 0.0
        %1521 = vmatpush1.msra.mxu0 0.0
        %1522 = vmatprep.subr.mxu0 0.0
        %1523 = vmatpush1.msra.mxu0 0.0
        %1524 = vmatprep.subr.mxu0 0.0
        %1525 = vmatpush1.msra.mxu0 0.0
        %1526 = vmatprep.subr.mxu0 0.0
        %1527 = vmatpush1.msra.mxu0 0.0
        %1528 = vmatprep.subr.mxu0 0.0
        %1529 = vmatpush1.msra.mxu0 0.0
        %1530 = vmatprep.subr.mxu0 0.0
        %1531 = vmatpush1.msra.mxu0 0.0
        %1532 = vmatprep.subr.mxu0 0.0
        %1533 = vmatpush1.msra.mxu0 0.0
        %1534 = vmatprep.subr.mxu0 0.0
        %1535 = vmatpush1.msra.mxu0 0.0
        %1536 = vmatprep.subr.mxu0 0.0
        %1537 = vmatpush1.msra.mxu0 0.0
        %1538 = vmatprep.subr.mxu0 0.0
        %1539 = vmatpush1.msra.mxu0 0.0
        %1540 = vmatprep.subr.mxu0 0.0
        %1541 = vmatpush1.msra.mxu0 0.0
        %1542 = vmatprep.subr.mxu0 0.0
        %1543 = vmatpush1.msra.mxu0 0.0
        %1544 = vmatprep.subr.mxu0 0.0
        %1545 = vmatpush1.msra.mxu0 0.0
        %1546 = vmatprep.subr.mxu0 0.0
        %1547 = vmatpush1.msra.mxu0 0.0
        %1548 = vmatprep.subr.mxu0 0.0
        %1549 = vmatpush1.msra.mxu0 0.0
        %1550 = vmatprep.subr.mxu0 0.0
        %1551 = vmatpush1.msra.mxu0 0.0
        %1552 = vmatprep.mubr.f32.mxu0 0.0
        %1553 = vmatmul.mubr.f32.gmra.mrb[0].mxu0 %v1450
        %v1554 = vpop.f32.mrb[0].mxu0
        %v1555 = vadd.f32 0.0, %v1554
        %v1556 = vpop.f32.mrb[0].mxu0
        %1557 = vdwg.mxu0
        %1558 = vmatprep.subr.mxu0 0.0
        %1559 = vmatpush1.msra.mxu0 %v1472
        %1560 = vmatprep.subr.mxu0 0.0
        %1561 = vmatpush1.msra.mxu0 %v1473
        %1562 = vmatprep.subr.mxu0 0.0
        %1563 = vmatpush1.msra.mxu0 %v1474
        %1564 = vmatprep.subr.mxu0 0.0
        %1565 = vmatpush1.msra.mxu0 %v1475
        %1566 = vmatprep.subr.mxu0 0.0
        %1567 = vmatpush1.msra.mxu0 %v1476
        %1568 = vmatprep.subr.mxu0 0.0
        %1569 = vmatpush1.msra.mxu0 %v1477
        %1570 = vmatprep.subr.mxu0 0.0
        %1571 = vmatpush1.msra.mxu0 %v1478
        %1572 = vmatprep.subr.mxu0 0.0
        %1573 = vmatpush1.msra.mxu0 %v1479
        %1574 = vmatprep.subr.mxu0 0.0
        %1575 = vmatpush1.msra.mxu0 %v1480
        %1576 = vmatprep.subr.mxu0 0.0
        %1577 = vmatpush1.msra.mxu0 %v1481
        %1578 = vmatprep.subr.mxu0 0.0
        %1579 = vmatpush1.msra.mxu0 %v1482
        %1580 = vmatprep.subr.mxu0 0.0
        %1581 = vmatpush1.msra.mxu0 %v1483
        %1582 = vmatprep.subr.mxu0 0.0
        %1583 = vmatpush1.msra.mxu0 %v1484
        %1584 = vmatprep.subr.mxu0 0.0
        %1585 = vmatpush1.msra.mxu0 %v1485
        %1586 = vmatprep.subr.mxu0 0.0
        %1587 = vmatpush1.msra.mxu0 %v1486
        %1588 = vmatprep.subr.mxu0 0.0
        %1589 = vmatpush1.msra.mxu0 %v1487
        %1590 = vmatprep.subr.mxu0 0.0
        %1591 = vmatpush1.msra.mxu0 0.0
        %1592 = vmatprep.subr.mxu0 0.0
        %1593 = vmatpush1.msra.mxu0 0.0
        %1594 = vmatprep.subr.mxu0 0.0
        %1595 = vmatpush1.msra.mxu0 0.0
        %1596 = vmatprep.subr.mxu0 0.0
        %1597 = vmatpush1.msra.mxu0 0.0
        %1598 = vmatprep.subr.mxu0 0.0
        %1599 = vmatpush1.msra.mxu0 0.0
        %1600 = vmatprep.subr.mxu0 0.0
        %1601 = vmatpush1.msra.mxu0 0.0
        %1602 = vmatprep.subr.mxu0 0.0
        %1603 = vmatpush1.msra.mxu0 0.0
        %1604 = vmatprep.subr.mxu0 0.0
        %1605 = vmatpush1.msra.mxu0 0.0
        %1606 = vmatprep.subr.mxu0 0.0
        %1607 = vmatpush1.msra.mxu0 0.0
        %1608 = vmatprep.subr.mxu0 0.0
        %1609 = vmatpush1.msra.mxu0 0.0
        %1610 = vmatprep.subr.mxu0 0.0
        %1611 = vmatpush1.msra.mxu0 0.0
        %1612 = vmatprep.subr.mxu0 0.0
        %1613 = vmatpush1.msra.mxu0 0.0
        %1614 = vmatprep.subr.mxu0 0.0
        %1615 = vmatpush1.msra.mxu0 0.0
        %1616 = vmatprep.subr.mxu0 0.0
        %1617 = vmatpush1.msra.mxu0 0.0
        %1618 = vmatprep.subr.mxu0 0.0
        %1619 = vmatpush1.msra.mxu0 0.0
        %1620 = vmatprep.subr.mxu0 0.0
        %1621 = vmatpush1.msra.mxu0 0.0
        %1622 = vmatprep.mubr.f32.mxu0 0.0
        %1623 = vmatmul.mubr.f32.gmra.mrb[0].mxu0 %v1471
        %v1624 = vpop.f32.mrb[0].mxu0
        %v1625 = vadd.f32 0.0, %v1624
        %v1626 = vpop.f32.mrb[0].mxu0
        %1627 = vdwg.mxu0
        %v1628 = vmul.f32 %v1555, %v1555
        %v1629 = vsub.f32 %v1625, %v1628
        %v1630 = vld [vmem:[%s293] sm:$0x1]
        %v1631 = vadd.f32 %v1629, 1e-05
        %v1632 = vrsqrt.pop %v1631
        %v1633 = vmul.f32 %v1630, %v1632
        %v1634 = vld [vmem:[%s296] sm:$0x1]
        %v1635 = vmul.f32 %v1555, %v1633
        %v1636 = vsub.f32 %v1634, %v1635
        %v1638 = vlaneseq
        %v1639 = vshrl.u32 %v1638, 7
        %v1640 = vsub.s32 0, %v1639
        %v1641 = vrot.slane %v1633, %v1640
        %v1643 = vmul.f32 %v1430, %v1641
        %v1644 = vmul.f32 %v1431, %v1641
        %v1645 = vmul.f32 %v1432, %v1641
        %v1646 = vmul.f32 %v1433, %v1641
        %v1647 = vmul.f32 %v1434, %v1641
        %v1648 = vmul.f32 %v1435, %v1641
        %v1649 = vmul.f32 %v1436, %v1641
        %v1650 = vmul.f32 %v1437, %v1641
        %v1652 = vlaneseq
        %v1653 = vshrl.u32 %v1652, 7
        %v1654 = vsub.s32 0, %v1653
        %v1655 = vrot.slane %v1636, %v1654
        %v1657 = vadd.f32 %v1643, %v1655
        %v1658 = vadd.f32 %v1644, %v1655
        %v1659 = vadd.f32 %v1645, %v1655
        %v1660 = vadd.f32 %v1646, %v1655
        %v1661 = vadd.f32 %v1647, %v1655
        %v1662 = vadd.f32 %v1648, %v1655
        %v1663 = vadd.f32 %v1649, %v1655
        %v1664 = vadd.f32 %v1650, %v1655
        %1665 = vst [vmem:[%s290] sm:$0xff] %v1657
        %1666 = vst [vmem:[%s290 + $0x8] sm:$0xff] %v1658
        %1667 = vst [vmem:[%s290 + $0x10] sm:$0xff] %v1659
        %1668 = vst [vmem:[%s290 + $0x18] sm:$0xff] %v1660
        %1669 = vst [vmem:[%s290 + $0x20] sm:$0xff] %v1661
        %1670 = vst [vmem:[%s290 + $0x28] sm:$0xff] %v1662
        %1671 = vst [vmem:[%s290 + $0x30] sm:$0xff] %v1663
        %1672 = vst [vmem:[%s290 + $0x38] sm:$0xff] %v1664
        %s1673 = sand.u32 %s172, 1
        %s1674 = scalar_lea.sflag [#allocation4], %s1673
        %s1675 = sand.u32 %s172, 1
        %s1676 = smul.addr %s1675, 64
        %s1677 = scalar_lea.vmem [#allocation5], %s1676
        // Predicated region
        $region49: #{tpu_custom_call.1} parent=43 // pred_check
          %p1678 = pneg %p182
        $region50: #{tpu_custom_call.1} parent=43 // pred_check_branch
          %1680 = sbr.rel (%p1678) target = $region52
        $region51: #{tpu_custom_call.1} parent=43 // pred_region
          %s1682 = ssub.s32 1024, 1024
          %1683 = vsyncadd %s1674, %s1682
          %s1684 = smul.addr %s23, 128
          %s1685 = scalar_lea.hbm %s6, %s1684
          %s1686 = sshll.u32 %s1677, 4
          %s1687 = int_to_ptr.vmem [resolvable:$true] %s1686
          %1692 = dma.vmem_to_hbm [thread:$0]  %s1687, 1024, %s1685, %s1674, 128, 256, 8
        $region52: #{tpu_custom_call.1} parent=43 // pred_fallthru
          _
      $region44: #{tpu_custom_call.1} parent=5 // pred_fallthru
        _
      %p1693 = scmp.le.s32.totalorder 2, %s18
      // Predicated region
      $region53: #{tpu_custom_call.1} parent=5 // pred_check
        %p1694 = pneg %p1693
      $region54: #{tpu_custom_call.1} parent=5 // pred_check_branch
        %1696 = sbr.rel (%p1694) target = $region56
      $region55: #{tpu_custom_call.1} parent=5 // pred_region
        %s1697 = ssub.s32 %s18, 2
        // Predicated region
        $region57: #{tpu_custom_call.1} parent=55 // pred_check
          %p1698 = pneg %p188
        $region58: #{tpu_custom_call.1} parent=55 // pred_check_branch
          %1700 = sbr.rel (%p1698) target = $region60
        $region59: #{tpu_custom_call.1} parent=55 // pred_region
          %s1701 = sand.u32 %s173, 1
          %s1702 = scalar_lea.sflag [#allocation4], %s1701
          %s1703 = sand.u32 %s173, 1
          %s1704 = smul.addr %s1703, 64
          %s1705 = scalar_lea.vmem [#allocation5], %s1704
          %1706 = dma.done %s1702, 1024
        $region60: #{tpu_custom_call.1} parent=55 // pred_fallthru
          _
      $region56: #{tpu_custom_call.1} parent=5 // pred_fallthru
        _
    $region6: #{tpu_custom_call.1} parent=1 // loop_footer
      %s22 = sadd.s32 1, %s18
    $region7: #{tpu_custom_call.1} parent=1 // loop_footer_branch
      %17 = sbr.rel target = $region3
    $region8: #{tpu_custom_call.1} parent=1 // loop_exit
      _
    %1707 = vsyncpa [#allocation3], 1
    %s1708 = scalar_lea.sflag [#allocation3], 1
    %1709 = vsyncpa %s1708, 1
    %1710 = vsyncpa [#allocation4], 1
    %s1711 = scalar_lea.sflag [#allocation4], 1
    %1712 = vsyncpa %s1711, 1

</llo_original>
